<compile_context>
chip_gen: v7x
topology: tpu7x:2x2x1
jax: 0.10.0
libtpu: 0.0.40
codegen_flags: <defaults>
</compile_context>

<pallas_src>
import numpy as np

import jax
import jax.numpy as jnp
from jax.experimental import pallas as pl
from jax.experimental.pallas import tpu as pltpu

NEG_SLOPE = 0.2  # LeakyReLU slope used by the NGCF propagation layer


def ngcf_conv_kernel(kmap_ref, kvalid_ref, a_ref, ek_ref, ei_ref,
                     w1_ref, w2_ref, b_ref, out_ref, side_acc):
    i = pl.program_id(0)
    kk = pl.program_id(1)
    nks = pl.num_programs(1)

    @pl.when(kk == 0)
    def _():
        side_acc[...] = jnp.zeros_like(side_acc)

    # Accumulate side = A[i_block, :] @ E over the (nonzero) column tiles of A.
    @pl.when(kvalid_ref[i * nks + kk] != 0)
    def _():
        side_acc[...] += jnp.dot(a_ref[...], ek_ref[...],
                                 preferred_element_type=jnp.float32)

    @pl.when(kk == nks - 1)
    def _():
        side = side_acc[...]
        e = ei_ref[...]                                   # f32 rows of E
        # Two K=d_in MXU matmuls — avoids the lane-concat relayout of the operand.
        pre = (jnp.dot(side + e, w1_ref[...], preferred_element_type=jnp.float32)
               + jnp.dot(side * e, w2_ref[...], preferred_element_type=jnp.float32)
               + b_ref[...])
        h = jnp.where(pre > 0, pre, NEG_SLOPE * pre)
        # F.normalize(h, p=2, dim=1): h / max(||h||, 1e-12) == h * rsqrt(max(ss, 1e-24))
        ss = jnp.sum(h * h, axis=-1, keepdims=True)
        hn = h * jax.lax.rsqrt(jnp.maximum(ss, 1e-24))
        # Lane-dense single store: [h | h_norm] -> (tm, 2*d_out) = 128 lanes.
        out_ref[...] = jnp.concatenate([h, hn], axis=-1).astype(out_ref.dtype)


def _divisor_tile(n, cap, granule, prefer_even_quotient=False):
    """Largest multiple of `granule` that divides n and is <= cap (>= granule)."""
    cap = max(min(cap, n), granule)
    cands = [t for t in range(granule, cap + 1, granule) if n % t == 0]
    if not cands:
        return n                      # block == full extent (always legal)
    if prefer_even_quotient:
        even = [t for t in cands if (n // t) % 2 == 0]
        if even:
            return max(even)
    return max(cands)


def _pick_tiles(n_padded):
    # tm: rows of A / output rows.  bf16 A packs 16 sublanes per vreg -> granule 16.
    # Prefer an EVEN number of row blocks so the "parallel" i axis splits evenly
    # across v7x's two TensorCores; cap keeps >= 2 row blocks and VMEM modest.
    tm = _divisor_tile(n_padded, min(1024, max(n_padded // 2, 16)), 16,
                       prefer_even_quotient=True)
    # tk: columns of A -> 128-lane granule; big tiles amortize per-step overhead.
    # tk <= 2048 keeps the double-buffered A stream <= 8 MiB even at tm = 1024.
    tk = _divisor_tile(n_padded, min(2048, n_padded), 128)
    return tm, tk


def build_block_schedule(adj, tm, tk):
    """Per-row-block list of nonzero column tiles of adj (host-side, concrete adj).

    Returns flattened (kmap, kvalid) int32 arrays of shape (ni*nks,), nks, and the
    number of real (non-padded) accumulation steps.  Padded steps repeat the last
    valid tile index (the DMA is deduped) and have kvalid == 0.
    """
    a = np.asarray(jax.device_get(adj))
    n = a.shape[0]
    ni, nk = n // tm, n // tk
    blk_nz = np.abs(a).reshape(ni, tm, nk, tk).sum(axis=(1, 3)) > 0
    nks = max(int(blk_nz.sum(axis=1).max()), 1)
    kmap = np.zeros((ni, nks), np.int32)
    kvalid = np.zeros((ni, nks), np.int32)
    for i in range(ni):
        nz = np.nonzero(blk_nz[i])[0]
        if nz.size:
            kmap[i, :nz.size] = nz
            kvalid[i, :nz.size] = 1
            kmap[i, nz.size:] = nz[-1]
    nnz_steps = max(int(kvalid.sum()), 1)
    return (jnp.asarray(kmap.reshape(-1)), jnp.asarray(kvalid.reshape(-1)),
            nks, nnz_steps)


def ngcf_conv(adj_m, e_mm, e_f32, w1, w2, b, kmap, kvalid, nks, nnz_steps, *, tm, tk):
    Np = adj_m.shape[0]
    d_in = e_f32.shape[1]
    d_out = w1.shape[1]
    assert Np % tm == 0 and Np % tk == 0
    grid = (Np // tm, nks)

    a_bytes = jnp.dtype(adj_m.dtype).itemsize
    e_bytes = jnp.dtype(e_mm.dtype).itemsize

    cost = pl.CostEstimate(
        flops=2 * nnz_steps * tm * tk * d_in + 4 * Np * d_in * d_out,
        transcendentals=Np,
        bytes_accessed=(nnz_steps * (tm * tk * a_bytes + tk * d_in * e_bytes)
                        + Np * d_in * 4 + Np * 2 * d_out * 4
                        + 2 * d_in * d_out * 4),
    )

    # Explicit VMEM budget (double-buffered inputs/outputs + accumulator scratch),
    # with 2x headroom; stays far below v7x's 64 MiB at the chosen tile caps.
    vmem_need = (2 * tm * tk * a_bytes            # A tiles (double buffer)
                 + 2 * tk * d_in * e_bytes        # E rows for the reduction
                 + 2 * tm * d_in * 4              # E rows for the epilogue
                 + 2 * (2 * d_in * d_out + d_out) * 4   # W1, W2, bias
                 + 2 * tm * 2 * d_out * 4         # packed output
                 + tm * d_in * 4)                 # side accumulator
    vmem_limit = int(min(max(2 * vmem_need, 16 * 2**20), 48 * 2**20))

    out = pl.pallas_call(
        ngcf_conv_kernel,
        out_shape=jax.ShapeDtypeStruct((Np, 2 * d_out), jnp.float32),
        grid_spec=pltpu.PrefetchScalarGridSpec(
            num_scalar_prefetch=2,
            grid=grid,
            in_specs=[
                # A tile: data-dependent column-tile index (skips zero quadrants).
                pl.BlockSpec((tm, tk),
                             lambda i, kk, km, kv: (i, km[i * nks + kk])),
                # E rows feeding the reduction (matmul dtype, usually bf16).
                pl.BlockSpec((tk, d_in),
                             lambda i, kk, km, kv: (km[i * nks + kk], 0)),
                # E rows for the elementwise epilogue (f32).
                pl.BlockSpec((tm, d_in), lambda i, kk, km, kv: (i, 0)),
                # W1, W2 and summed bias (resident, constant index).
                pl.BlockSpec((d_in, d_out), lambda i, kk, km, kv: (0, 0)),
                pl.BlockSpec((d_in, d_out), lambda i, kk, km, kv: (0, 0)),
                pl.BlockSpec((1, d_out), lambda i, kk, km, kv: (0, 0)),
            ],
            out_specs=pl.BlockSpec((tm, 2 * d_out), lambda i, kk, km, kv: (i, 0)),
            scratch_shapes=[pltpu.VMEM((tm, d_in), jnp.float32)],
        ),
        compiler_params=pltpu.CompilerParams(
            dimension_semantics=("parallel", "arbitrary"),
            vmem_limit_bytes=vmem_limit),
        cost_estimate=cost,
    )(kmap, kvalid, adj_m, e_mm, e_f32, w1, w2, b)

    return out  # packed [h | h_norm], shape (Np, 2*d_out)


def ngcf_forward(adj, embedding_weight0, layer_params, num_user, num_item,
                 *, matmul_dtype=jnp.bfloat16, schedule=None):
    """Returns (user_weight, item_weight) exactly like NGCF.forward() (eval mode)."""
    N = adj.shape[0]
    d0 = embedding_weight0.shape[1]

    # Pad N up to a multiple of 128: tiles never fall back to the full extent and
    # all granules divide the padded extent.  Padded rows/cols of A are zero, so
    # real-row results are unaffected; padded output rows are sliced away.
    Np = ((N + 127) // 128) * 128
    if Np != N:
        adj_p = jnp.zeros((Np, Np), adj.dtype).at[:N, :N].set(adj)
        emb_p = jnp.zeros((Np, d0), embedding_weight0.dtype).at[:N].set(embedding_weight0)
    else:
        adj_p, emb_p = adj, embedding_weight0

    tm, tk = _pick_tiles(Np)
    if schedule is None:
        # Host-side schedule from the concrete adjacency; built once, reused for
        # every layer.  TODO(synk): precompute and pass in for jitted use / if adj
        # changes (e.g. training-mode sparse dropout).
        schedule = build_block_schedule(adj_p, tm, tk)
    kmap, kvalid, nks, nnz_steps = schedule
    adj_m = adj_p.astype(matmul_dtype)

    node_feat = emb_p
    all_embeddings = [emb_p]
    for (w1, b1, w2, b2) in layer_params:
        b = b1 + b2                              # (1, d_out)
        out = ngcf_conv(adj_m, node_feat.astype(matmul_dtype), node_feat,
                        w1, w2, b, kmap, kvalid, nks, nnz_steps, tm=tm, tk=tk)
        d_out = w1.shape[1]
        node_feat = out[:, :d_out]               # h feeds the next layer
        all_embeddings.append(out[:, d_out:])    # h_norm goes into the final concat
    embedding_weight = jnp.concatenate(all_embeddings, axis=-1)[:N]
    user_weight = embedding_weight[:num_user]
    item_weight = embedding_weight[num_user:num_user + num_item]
    return user_weight, item_weight


def ngcf_forward_ref(adj, emb0, layer_params, num_user, num_item, *, bf16_side=True):
    """Pure-JAX reference.  bf16_side=True matches the kernel's bf16 A@E operands."""
    adj_m = adj.astype(jnp.bfloat16) if bf16_side else adj
    node_feat = emb0
    all_embeddings = [node_feat]
    for (w1, b1, w2, b2) in layer_params:
        nf = node_feat.astype(jnp.bfloat16) if bf16_side else node_feat
        side = jnp.dot(adj_m, nf, preferred_element_type=jnp.float32)
        pre = (side + node_feat) @ w1 + b1 + (side * node_feat) @ w2 + b2
        h = jnp.where(pre > 0, pre, NEG_SLOPE * pre)
        ss = jnp.sum(h * h, axis=-1, keepdims=True)
        all_embeddings.append(h * jax.lax.rsqrt(jnp.maximum(ss, 1e-24)))
        node_feat = h
    ew = jnp.concatenate(all_embeddings, axis=-1)
    return ew[:num_user], ew[num_user:num_user + num_item]


def xavier_uniform(key, shape):
    fan_in, fan_out = shape[0], shape[1]
    bound = (6.0 / (fan_in + fan_out)) ** 0.5
    return jax.random.uniform(key, shape, jnp.float32, -bound, bound)


def _make_inputs(key, num_user, num_item, n_layers, dims):
    N = num_user + num_item
    keys = jax.random.split(key, 2 + 2 * n_layers)
    k_adj, k_emb = keys[0], keys[1]

    # Deterministic bipartite interaction graph -> symmetric-normalized dense adjacency.
    R = (jax.random.uniform(k_adj, (num_user, num_item)) < 0.1).astype(jnp.float32)
    A = jnp.block([[jnp.zeros((num_user, num_user)), R],
                   [R.T, jnp.zeros((num_item, num_item))]])
    deg = jnp.maximum(A.sum(axis=1), 1.0)
    d_is = 1.0 / jnp.sqrt(deg)
    adj = A * d_is[:, None] * d_is[None, :]

    emb0 = xavier_uniform(k_emb, (N, dims[0]))        # nn.Embedding weight

    layer_params = []
    for l in range(n_layers):
        kw1, kw2 = jax.random.split(keys[2 + 2 * l])
        w1 = xavier_uniform(kw1, (dims[l], dims[l + 1]))
        w2 = xavier_uniform(kw2, (dims[l], dims[l + 1]))
        b1 = jnp.zeros((1, dims[l + 1]), jnp.float32)
        b2 = jnp.zeros((1, dims[l + 1]), jnp.float32)
        layer_params.append((w1, b1, w2, b2))
    return adj, emb0, layer_params


if __name__ == "__main__":
    n_layers = 2
    dims = [64, 64, 64]  # len == n_layers + 1
    key = jax.random.PRNGKey(0)
    k1, k2 = jax.random.split(key)

    # ---- Config 1: N multiple of 128 (no padding path) -----------------------
    num_user, num_item = 128, 128
    adj, emb0, layer_params = _make_inputs(k1, num_user, num_item, n_layers, dims)

    user_w, item_w = ngcf_forward(adj, emb0, layer_params, num_user, num_item)
    jax.block_until_ready((user_w, item_w))

    user_ref, item_ref = ngcf_forward_ref(adj, emb0, layer_params, num_user, num_item,
                                          bf16_side=True)
    assert user_w.shape == (num_user, sum(dims)) and item_w.shape == (num_item, sum(dims))
    assert jnp.allclose(user_w, user_ref, atol=2e-3, rtol=2e-3)
    assert jnp.allclose(item_w, item_ref, atol=2e-3, rtol=2e-3)

    # Informational: deviation vs. the full-f32 reference (bf16 A@E loosens this).
    user_f32, item_f32 = ngcf_forward_ref(adj, emb0, layer_params, num_user, num_item,
                                          bf16_side=False)
    max_diff = float(jnp.maximum(jnp.abs(user_w - user_f32).max(),
                                 jnp.abs(item_w - item_f32).max()))
    print(f"config1 max |pallas - f32 reference| = {max_diff:.3e}")

    # ---- Config 2: awkward N (exercises the pad-to-128 path) -----------------
    num_user2, num_item2 = 100, 80
    adj2, emb02, layer_params2 = _make_inputs(k2, num_user2, num_item2, n_layers, dims)

    user_w2, item_w2 = ngcf_forward(adj2, emb02, layer_params2, num_user2, num_item2)
    jax.block_until_ready((user_w2, item_w2))

    user_ref2, item_ref2 = ngcf_forward_ref(adj2, emb02, layer_params2,
                                            num_user2, num_item2, bf16_side=True)
    assert user_w2.shape == (num_user2, sum(dims)) and item_w2.shape == (num_item2, sum(dims))
    assert jnp.allclose(user_w2, user_ref2, atol=5e-3, rtol=5e-3)
    assert jnp.allclose(item_w2, item_ref2, atol=5e-3, rtol=5e-3)

    print("KERNEL_OK")
</pallas_src>

<mosaic_0001>
module attributes {stable_mosaic.version = 11 : i64} {
  func.func @ngcf_conv_kernel(%arg0: i32, %arg1: i32, %arg2: memref<2xi32, #tpu.memory_space<smem>>, %arg3: memref<2xi32, #tpu.memory_space<smem>>, %arg4: memref<128x256xbf16, #tpu.memory_space<vmem>>, %arg5: memref<256x64xbf16, #tpu.memory_space<vmem>>, %arg6: memref<128x64xf32, #tpu.memory_space<vmem>>, %arg7: memref<64x64xf32, #tpu.memory_space<vmem>>, %arg8: memref<64x64xf32, #tpu.memory_space<vmem>>, %arg9: memref<1x64xf32, #tpu.memory_space<vmem>>, %arg10: memref<128x128xf32, #tpu.memory_space<vmem>>, %arg11: memref<128x64xf32, #tpu.memory_space<vmem>>) attributes {dimension_semantics = [#tpu.dimension_semantics<parallel>, #tpu.dimension_semantics<arbitrary>], iteration_bounds = array<i64: 2, 1>, scalar_prefetch = 2 : i64, scratch_operands = 1 : i64, tpu.core_type = #tpu.core_type<tc>, window_params = [{transform_indices = @transform_0, window_bounds = array<i64: 128, 256>}, {transform_indices = @transform_1, window_bounds = array<i64: 256, 64>}, {transform_indices = @transform_2, window_bounds = array<i64: 128, 64>}, {pipeline_mode = #tpu.pipeline_mode<synchronous>, transform_indices = @transform_3, window_bounds = array<i64: 64, 64>}, {pipeline_mode = #tpu.pipeline_mode<synchronous>, transform_indices = @transform_4, window_bounds = array<i64: 64, 64>}, {pipeline_mode = #tpu.pipeline_mode<synchronous>, transform_indices = @transform_5, window_bounds = array<i64: 1, 64>}, {transform_indices = @transform_6, window_bounds = array<i64: 128, 128>}]} {
    %c0_i32 = arith.constant 0 : i32
    %0 = arith.cmpi eq, %arg1, %c0_i32 : i32
    %1 = arith.extui %0 : i1 to i32
    %c0_i32_0 = arith.constant 0 : i32
    %2 = arith.cmpi ne, %1, %c0_i32_0 : i32
    scf.if %2 {
      %cst = arith.constant 0.000000e+00 : f32
      %13 = vector.broadcast %cst : f32 to vector<128x64xf32>
      %c0 = arith.constant 0 : index
      %c0_5 = arith.constant 0 : index
      %14 = vector.load %arg11[%c0, %c0_5] : memref<128x64xf32, #tpu.memory_space<vmem>>, vector<128x64xf32>
      tpu.vector_store %arg11[%c0, %c0_5], %13 {strides = array<i32>} : memref<128x64xf32, #tpu.memory_space<vmem>>, vector<128x64xf32>,
    } else {
    }
    %c1_i32 = arith.constant 1 : i32
    %3 = arith.muli %arg0, %c1_i32 : i32
    %4 = arith.addi %3, %arg1 : i32
    %5 = arith.index_cast %4 : i32 to index
    %6 = memref.load %arg3[%5] : memref<2xi32, #tpu.memory_space<smem>>
    %c0_i32_1 = arith.constant 0 : i32
    %7 = arith.cmpi ne, %6, %c0_i32_1 : i32
    %8 = arith.extui %7 : i1 to i32
    %c0_i32_2 = arith.constant 0 : i32
    %9 = arith.cmpi ne, %8, %c0_i32_2 : i32
    scf.if %9 {
      %c0 = arith.constant 0 : index
      %c0_5 = arith.constant 0 : index
      %13 = vector.load %arg11[%c0, %c0_5] : memref<128x64xf32, #tpu.memory_space<vmem>>, vector<128x64xf32>
      %c0_6 = arith.constant 0 : index
      %c0_7 = arith.constant 0 : index
      %14 = vector.load %arg4[%c0_6, %c0_7] : memref<128x256xbf16, #tpu.memory_space<vmem>>, vector<128x256xbf16>
      %c0_8 = arith.constant 0 : index
      %c0_9 = arith.constant 0 : index
      %15 = vector.load %arg5[%c0_8, %c0_9] : memref<256x64xbf16, #tpu.memory_space<vmem>>, vector<256x64xbf16>
      %cst = arith.constant dense<0.000000e+00> : vector<128x64xf32>
      %16 = tpu.matmul %14, %15, %cst {dimension_numbers = #tpu.dot_dimension_numbers<[1], [0], [0], [1], [0, 0, 1, 1], [], []>} : vector<128x256xbf16>, vector<256x64xbf16>, vector<128x64xf32> -> vector<128x64xf32>
      %17 = arith.addf %13, %16 : vector<128x64xf32>
      %c0_10 = arith.constant 0 : index
      %c0_11 = arith.constant 0 : index
      %18 = vector.load %arg11[%c0_10, %c0_11] : memref<128x64xf32, #tpu.memory_space<vmem>>, vector<128x64xf32>
      tpu.vector_store %arg11[%c0_10, %c0_11], %17 {strides = array<i32>} : memref<128x64xf32, #tpu.memory_space<vmem>>, vector<128x64xf32>,
    } else {
    }
    %c0_i32_3 = arith.constant 0 : i32
    %10 = arith.cmpi eq, %arg1, %c0_i32_3 : i32
    %11 = arith.extui %10 : i1 to i32
    %c0_i32_4 = arith.constant 0 : i32
    %12 = arith.cmpi ne, %11, %c0_i32_4 : i32
    scf.if %12 {
      %c0 = arith.constant 0 : index
      %c0_5 = arith.constant 0 : index
      %13 = vector.load %arg11[%c0, %c0_5] : memref<128x64xf32, #tpu.memory_space<vmem>>, vector<128x64xf32>
      %c0_6 = arith.constant 0 : index
      %c0_7 = arith.constant 0 : index
      %14 = vector.load %arg6[%c0_6, %c0_7] : memref<128x64xf32, #tpu.memory_space<vmem>>, vector<128x64xf32>
      %15 = arith.addf %13, %14 : vector<128x64xf32>
      %c0_8 = arith.constant 0 : index
      %c0_9 = arith.constant 0 : index
      %16 = vector.load %arg7[%c0_8, %c0_9] : memref<64x64xf32, #tpu.memory_space<vmem>>, vector<64x64xf32>
      %cst = arith.constant dense<0.000000e+00> : vector<128x64xf32>
      %17 = tpu.matmul %15, %16, %cst {dimension_numbers = #tpu.dot_dimension_numbers<[1], [0], [0], [1], [0, 0, 1, 1], [], []>} : vector<128x64xf32>, vector<64x64xf32>, vector<128x64xf32> -> vector<128x64xf32>
      %18 = arith.mulf %13, %14 : vector<128x64xf32>
      %c0_10 = arith.constant 0 : index
      %c0_11 = arith.constant 0 : index
      %19 = vector.load %arg8[%c0_10, %c0_11] : memref<64x64xf32, #tpu.memory_space<vmem>>, vector<64x64xf32>
      %cst_12 = arith.constant dense<0.000000e+00> : vector<128x64xf32>
      %20 = tpu.matmul %18, %19, %cst_12 {dimension_numbers = #tpu.dot_dimension_numbers<[1], [0], [0], [1], [0, 0, 1, 1], [], []>} : vector<128x64xf32>, vector<64x64xf32>, vector<128x64xf32> -> vector<128x64xf32>
      %21 = arith.addf %17, %20 : vector<128x64xf32>
      %c0_13 = arith.constant 0 : index
      %c0_14 = arith.constant 0 : index
      %22 = vector.load %arg9[%c0_13, %c0_14] : memref<1x64xf32, #tpu.memory_space<vmem>>, vector<1x64xf32>
      %23 = vector.broadcast %22 : vector<1x64xf32> to vector<128x64xf32>
      %24 = arith.addf %21, %23 : vector<128x64xf32>
      %cst_15 = arith.constant 0.000000e+00 : f32
      %25 = vector.broadcast %cst_15 : f32 to vector<128x64xf32>
      %26 = arith.cmpf ogt, %24, %25 : vector<128x64xf32>
      %cst_16 = arith.constant 2.000000e-01 : f32
      %27 = vector.broadcast %cst_16 : f32 to vector<128x64xf32>
      %28 = arith.mulf %27, %24 : vector<128x64xf32>
      %29 = arith.select %26, %24, %28 : vector<128x64xi1>, vector<128x64xf32>
      %30 = arith.mulf %29, %29 : vector<128x64xf32>
      %cst_17 = arith.constant dense<0.000000e+00> : vector<128xf32>
      %31 = vector.multi_reduction <add>, %30, %cst_17 [1] : vector<128x64xf32> to vector<128xf32>
      %32 = vector.shape_cast %31 : vector<128xf32> to vector<128x1xf32>
      %cst_18 = arith.constant 1.000000e-24 : f32
      %33 = vector.broadcast %cst_18 : f32 to vector<128x1xf32>
      %34 = arith.maximumf %32, %33 : vector<128x1xf32>
      %35 = math.rsqrt %34 : vector<128x1xf32>
      %36 = vector.broadcast %35 : vector<128x1xf32> to vector<128x64xf32>
      %37 = arith.mulf %29, %36 : vector<128x64xf32>
      %38 = tpu.concatenate %29, %37 in 1 : vector<128x64xf32>, vector<128x64xf32> -> vector<128x128xf32>
      %c0_19 = arith.constant 0 : index
      %c0_20 = arith.constant 0 : index
      %39 = vector.load %arg10[%c0_19, %c0_20] : memref<128x128xf32, #tpu.memory_space<vmem>>, vector<128x128xf32>
      tpu.vector_store %arg10[%c0_19, %c0_20], %38 {strides = array<i32>} : memref<128x128xf32, #tpu.memory_space<vmem>>, vector<128x128xf32>,
    } else {
    }
    return
  }
  func.func @transform_0(%arg0: i32, %arg1: i32, %arg2: memref<2xi32, #tpu.memory_space<smem>>, %arg3: memref<2xi32, #tpu.memory_space<smem>>) -> (i32, i32) {
    %c1_i32 = arith.constant 1 : i32
    %0 = arith.muli %arg0, %c1_i32 : i32
    %1 = arith.addi %0, %arg1 : i32
    %2 = arith.index_cast %1 : i32 to index
    %3 = memref.load %arg2[%2] : memref<2xi32, #tpu.memory_space<smem>>
    %c0_i32 = arith.constant 0 : i32
    return %arg0, %3 : i32, i32
  }
  func.func @transform_1(%arg0: i32, %arg1: i32, %arg2: memref<2xi32, #tpu.memory_space<smem>>, %arg3: memref<2xi32, #tpu.memory_space<smem>>) -> (i32, i32) {
    %c1_i32 = arith.constant 1 : i32
    %0 = arith.muli %arg0, %c1_i32 : i32
    %1 = arith.addi %0, %arg1 : i32
    %2 = arith.index_cast %1 : i32 to index
    %3 = memref.load %arg2[%2] : memref<2xi32, #tpu.memory_space<smem>>
    %c0_i32 = arith.constant 0 : i32
    %c0_i32_0 = arith.constant 0 : i32
    return %3, %c0_i32 : i32, i32
  }
  func.func @transform_2(%arg0: i32, %arg1: i32, %arg2: memref<2xi32, #tpu.memory_space<smem>>, %arg3: memref<2xi32, #tpu.memory_space<smem>>) -> (i32, i32) {
    %c0_i32 = arith.constant 0 : i32
    %c0_i32_0 = arith.constant 0 : i32
    return %arg0, %c0_i32 : i32, i32
  }
  func.func @transform_3(%arg0: i32, %arg1: i32, %arg2: memref<2xi32, #tpu.memory_space<smem>>, %arg3: memref<2xi32, #tpu.memory_space<smem>>) -> (i32, i32) {
    %c0_i32 = arith.constant 0 : i32
    %c0_i32_0 = arith.constant 0 : i32
    %c0_i32_1 = arith.constant 0 : i32
    return %c0_i32, %c0_i32_0 : i32, i32
  }
  func.func @transform_4(%arg0: i32, %arg1: i32, %arg2: memref<2xi32, #tpu.memory_space<smem>>, %arg3: memref<2xi32, #tpu.memory_space<smem>>) -> (i32, i32) {
    %c0_i32 = arith.constant 0 : i32
    %c0_i32_0 = arith.constant 0 : i32
    %c0_i32_1 = arith.constant 0 : i32
    return %c0_i32, %c0_i32_0 : i32, i32
  }
  func.func @transform_5(%arg0: i32, %arg1: i32, %arg2: memref<2xi32, #tpu.memory_space<smem>>, %arg3: memref<2xi32, #tpu.memory_space<smem>>) -> (i32, i32) {
    %c0_i32 = arith.constant 0 : i32
    %c0_i32_0 = arith.constant 0 : i32
    %c0_i32_1 = arith.constant 0 : i32
    return %c0_i32, %c0_i32_0 : i32, i32
  }
  func.func @transform_6(%arg0: i32, %arg1: i32, %arg2: memref<2xi32, #tpu.memory_space<smem>>, %arg3: memref<2xi32, #tpu.memory_space<smem>>) -> (i32, i32) {
    %c0_i32 = arith.constant 0 : i32
    %c0_i32_0 = arith.constant 0 : i32
    return %arg0, %c0_i32 : i32, i32
  }
}

</mosaic_0001>

<llo_original>
// kernel: tpu_custom_call.1
$region0: #{tpu_custom_call.1}
  #allocation0 [shape = 'u32[]', space=smem, size = 0x4, offset = 0x4, fixed_abs, tag = 'smem constant byte address 0x4 - core index']
  #allocation1 [shape = 'u32[144,128]{1,0:T(1,128)}', space=vmem, size = 0x12000, scoped, tag = 'internal scratch']
  #allocation2 [shape = 'f32[128,64]{1,0:T(8,128)}', space=vmem, size = 0x10000, scoped, tag = 'scratch operand']
  #allocation3 [shape = 's32[1]{0}', space=sflag, size = 0x4, scoped, tag = 'scoped memory for tpu_custom_call.1']
  #allocation4 [shape = 'u8[512]{0}', space=smem, size = 0x200, scoped, tag = 'prefetched SMEM operand 0']
  #allocation5 [shape = 'u8[512]{0}', space=smem, size = 0x200, scoped, tag = 'prefetched SMEM operand 1']
  %s0 = inlined_call_operand.vmem [shape: s32[2], index: 0, kind: input, shape index: {}]
  %s1 = inlined_call_operand.vmem [shape: s32[2], index: 1, kind: input, shape index: {}]
  %s2 = inlined_call_operand.vmem [shape: bf16[256,256], index: 2, kind: input, shape index: {}]
  %s3 = inlined_call_operand.vmem [shape: bf16[256,64], index: 3, kind: input, shape index: {}]
  %s4 = inlined_call_operand.vmem [shape: f32[256,64], index: 4, kind: input, shape index: {}]
  %s5 = inlined_call_operand.vmem [shape: f32[64,64], index: 5, kind: input, shape index: {}]
  %s6 = inlined_call_operand.vmem [shape: f32[64,64], index: 6, kind: input, shape index: {}]
  %s7 = inlined_call_operand.vmem [shape: f32[1,64], index: 7, kind: input, shape index: {}]
  %s8 = inlined_call_operand.hbm [shape: f32[256,128], index: 8, kind: output, shape index: {}]
  %s9 = sld [smem:[#allocation0]]
  $region69: #{tpu_custom_call.1} parent=0
    _
  %s11 = ssub.s32 1, %s9
  %s12 = scalar_select 0, %s11, %s9
  %s13 = sshll.u32 %s0, 4
  %s14 = int_to_ptr.vmem [resolvable:$true] %s13
  %16 = dma.vmem_to_smem %s14, 16, [#allocation4], [#allocation3]
  %s17 = sshll.u32 %s1, 4
  %s18 = int_to_ptr.vmem [resolvable:$true] %s17
  %20 = dma.vmem_to_smem %s18, 16, [#allocation5], [#allocation3]
  %21 = dma.done [#allocation3], 32
  %22 = sfence
  $region1: #{tpu_custom_call.1} parent=0
    #allocation6 [shape = 'u8[131072]{0}', space=vmem, size = 0x20000, scoped, tag = 'output window, operand 0']
    #allocation7 [shape = 's32[2]{0}', space=sflag, size = 0x8, scoped, tag = 'scoped memory for tpu_custom_call.1']
    %23 = vsyncpa [#allocation7], 0
    %s24 = scalar_lea.sflag [#allocation7], 1
    %25 = vsyncpa %s24, 0
    loop: start=0, step=1, limit=4
    $region2: #{tpu_custom_call.1} parent=1 // loop_pre_header
      _
    $region3: #{tpu_custom_call.1} parent=1 // loop_header
      %s27 = sphi 0, %s31
      %p28 = scmp.ge.s32.totalorder %s27, 4
      %s34 = sphi 0, %s46
      %s35 = sphi 0, %s42
      %s36 = sphi 0, %s34
      %s37 = sphi 0, %s35
      %s38 = sphi 0, %s36
      %s39 = sphi 0, %s37
      %s55 = sphi 0, %s57
      %s58 = sphi 0, %s55
      %s59 = sphi 0, %s58
      %s75 = sphi 0, %s59
      %s85 = sphi 0, %s87
      %s88 = sphi 0, %s85
      %s89 = sphi 0, %s88
      %s105 = sphi 0, %s89
      %s111 = sphi 0, %s113
      %s114 = sphi 0, %s111
      %s115 = sphi 0, %s114
      %s131 = sphi 0, %s115
      %s135 = sphi 0, %s135
      %s137 = sphi 0, %s135
      %s138 = sphi 0, %s137
      %s152 = sphi 0, %s138
      %s156 = sphi 0, %s156
      %s158 = sphi 0, %s156
      %s159 = sphi 0, %s158
      %s173 = sphi 0, %s159
      %s177 = sphi 0, %s177
      %s179 = sphi 0, %s177
      %s180 = sphi 0, %s179
      %s194 = sphi 0, %s180
      %s200 = sphi 0, %s202
      %s203 = sphi 0, %s200
      %s204 = sphi 0, %s203
      %s220 = sphi 0, %s204
    $region4: #{tpu_custom_call.1} parent=1 // loop_header_branch
      %30 = sbr.rel (%p28) target = $region8
    $region5: #{tpu_custom_call.1} parent=1 // loop_body
      %s32 = ssub.s32 %s27, 1
      %s33 = ssub.s32 %s27, 2
      %s40 = sadd.s32 1, %s35
      %p41 = scmp.ge.s32.totalorder %s40, 1
      %s42 = scalar_select %p41, 0, %s40
      %s43 = sadd.s32 1, %s34
      %s44 = scalar_select %p41, %s43, %s34
      %p45 = scmp.ge.s32.totalorder %s44, 2
      %s46 = scalar_select %p45, 0, %s44
      %s47 = sadd.s32 %s34, %s35
      %s48 = sld [smem:[#allocation4 + %s47]]
      %s49 = sadd.s32 %s46, %s42
      %s50 = sld [smem:[#allocation4 + %s49]]
      %s51 = ssub.s32 %s34, %s46
      %s52 = ssub.s32 %s48, %s50
      %s53 = sor.u32 %s51, %s52
      %p54 = scmp.eq.s32.totalorder %s53, 0
      %s56 = sadd.s32 %s55, 1
      %s57 = scalar_select %p54, %s55, %s56
      %p60 = pneg %p54
      %p61 = scmp.eq.s32.totalorder %s27, 1
      %p62 = por %p60, %p61
      %p63 = scmp.ne.s32.totalorder %s55, %s58
      %p64 = scmp.eq.s32.totalorder %s27, 0
      %p65 = por %p63, %p64
      %p66 = scmp.ne.s32.totalorder %s55, %s58
      %p67 = scmp.eq.s32.totalorder %s32, 1
      %p68 = por %p66, %p67
      %p69 = scmp.ne.s32.totalorder %s58, %s59
      %p70 = scmp.eq.s32.totalorder %s32, 0
      %p71 = por %p69, %p70
      %p72 = scmp.ne.s32.totalorder %s58, %s59
      %p73 = scmp.eq.s32.totalorder %s33, 1
      %p74 = por %p72, %p73
      %p76 = scmp.ne.s32.totalorder %s59, %s75
      %p77 = scmp.eq.s32.totalorder %s33, 0
      %p78 = por %p76, %p77
      %s79 = sadd.s32 %s34, %s35
      %s80 = sld [smem:[#allocation4 + %s79]]
      %s81 = sadd.s32 %s46, %s42
      %s82 = sld [smem:[#allocation4 + %s81]]
      %s83 = ssub.s32 %s80, %s82
      %p84 = scmp.eq.s32.totalorder %s83, 0
      %s86 = sadd.s32 %s85, 1
      %s87 = scalar_select %p84, %s85, %s86
      %p90 = pneg %p84
      %p91 = scmp.eq.s32.totalorder %s27, 1
      %p92 = por %p90, %p91
      %p93 = scmp.ne.s32.totalorder %s85, %s88
      %p94 = scmp.eq.s32.totalorder %s27, 0
      %p95 = por %p93, %p94
      %p96 = scmp.ne.s32.totalorder %s85, %s88
      %p97 = scmp.eq.s32.totalorder %s32, 1
      %p98 = por %p96, %p97
      %p99 = scmp.ne.s32.totalorder %s88, %s89
      %p100 = scmp.eq.s32.totalorder %s32, 0
      %p101 = por %p99, %p100
      %p102 = scmp.ne.s32.totalorder %s88, %s89
      %p103 = scmp.eq.s32.totalorder %s33, 1
      %p104 = por %p102, %p103
      %p106 = scmp.ne.s32.totalorder %s89, %s105
      %p107 = scmp.eq.s32.totalorder %s33, 0
      %p108 = por %p106, %p107
      %s109 = ssub.s32 %s34, %s46
      %p110 = scmp.eq.s32.totalorder %s109, 0
      %s112 = sadd.s32 %s111, 1
      %s113 = scalar_select %p110, %s111, %s112
      %p116 = pneg %p110
      %p117 = scmp.eq.s32.totalorder %s27, 1
      %p118 = por %p116, %p117
      %p119 = scmp.ne.s32.totalorder %s111, %s114
      %p120 = scmp.eq.s32.totalorder %s27, 0
      %p121 = por %p119, %p120
      %p122 = scmp.ne.s32.totalorder %s111, %s114
      %p123 = scmp.eq.s32.totalorder %s32, 1
      %p124 = por %p122, %p123
      %p125 = scmp.ne.s32.totalorder %s114, %s115
      %p126 = scmp.eq.s32.totalorder %s32, 0
      %p127 = por %p125, %p126
      %p128 = scmp.ne.s32.totalorder %s114, %s115
      %p129 = scmp.eq.s32.totalorder %s33, 1
      %p130 = por %p128, %p129
      %p132 = scmp.ne.s32.totalorder %s115, %s131
      %p133 = scmp.eq.s32.totalorder %s33, 0
      %p134 = por %p132, %p133
      %s136 = sadd.s32 %s135, 1
      %p139 = scmp.eq.s32.totalorder %s27, 1
      %p140 = scmp.ne.s32.totalorder %s135, %s137
      %p141 = scmp.eq.s32.totalorder %s27, 0
      %p142 = por %p140, %p141
      %p143 = scmp.ne.s32.totalorder %s135, %s137
      %p144 = scmp.eq.s32.totalorder %s32, 1
      %p145 = por %p143, %p144
      %p146 = scmp.ne.s32.totalorder %s137, %s138
      %p147 = scmp.eq.s32.totalorder %s32, 0
      %p148 = por %p146, %p147
      %p149 = scmp.ne.s32.totalorder %s137, %s138
      %p150 = scmp.eq.s32.totalorder %s33, 1
      %p151 = por %p149, %p150
      %p153 = scmp.ne.s32.totalorder %s138, %s152
      %p154 = scmp.eq.s32.totalorder %s33, 0
      %p155 = por %p153, %p154
      %s157 = sadd.s32 %s156, 1
      %p160 = scmp.eq.s32.totalorder %s27, 1
      %p161 = scmp.ne.s32.totalorder %s156, %s158
      %p162 = scmp.eq.s32.totalorder %s27, 0
      %p163 = por %p161, %p162
      %p164 = scmp.ne.s32.totalorder %s156, %s158
      %p165 = scmp.eq.s32.totalorder %s32, 1
      %p166 = por %p164, %p165
      %p167 = scmp.ne.s32.totalorder %s158, %s159
      %p168 = scmp.eq.s32.totalorder %s32, 0
      %p169 = por %p167, %p168
      %p170 = scmp.ne.s32.totalorder %s158, %s159
      %p171 = scmp.eq.s32.totalorder %s33, 1
      %p172 = por %p170, %p171
      %p174 = scmp.ne.s32.totalorder %s159, %s173
      %p175 = scmp.eq.s32.totalorder %s33, 0
      %p176 = por %p174, %p175
      %s178 = sadd.s32 %s177, 1
      %p181 = scmp.eq.s32.totalorder %s27, 1
      %p182 = scmp.ne.s32.totalorder %s177, %s179
      %p183 = scmp.eq.s32.totalorder %s27, 0
      %p184 = por %p182, %p183
      %p185 = scmp.ne.s32.totalorder %s177, %s179
      %p186 = scmp.eq.s32.totalorder %s32, 1
      %p187 = por %p185, %p186
      %p188 = scmp.ne.s32.totalorder %s179, %s180
      %p189 = scmp.eq.s32.totalorder %s32, 0
      %p190 = por %p188, %p189
      %p191 = scmp.ne.s32.totalorder %s179, %s180
      %p192 = scmp.eq.s32.totalorder %s33, 1
      %p193 = por %p191, %p192
      %p195 = scmp.ne.s32.totalorder %s180, %s194
      %p196 = scmp.eq.s32.totalorder %s33, 0
      %p197 = por %p195, %p196
      %s198 = ssub.s32 %s34, %s46
      %p199 = scmp.eq.s32.totalorder %s198, 0
      %s201 = sadd.s32 %s200, 1
      %s202 = scalar_select %p199, %s200, %s201
      %p205 = pneg %p199
      %p206 = scmp.eq.s32.totalorder %s27, 1
      %p207 = por %p205, %p206
      %p208 = scmp.ne.s32.totalorder %s200, %s203
      %p209 = scmp.eq.s32.totalorder %s27, 0
      %p210 = por %p208, %p209
      %p211 = scmp.ne.s32.totalorder %s200, %s203
      %p212 = scmp.eq.s32.totalorder %s32, 1
      %p213 = por %p211, %p212
      %p214 = scmp.ne.s32.totalorder %s203, %s204
      %p215 = scmp.eq.s32.totalorder %s32, 0
      %p216 = por %p214, %p215
      %p217 = scmp.ne.s32.totalorder %s203, %s204
      %p218 = scmp.eq.s32.totalorder %s33, 1
      %p219 = por %p217, %p218
      %p221 = scmp.ne.s32.totalorder %s204, %s220
      %p222 = scmp.eq.s32.totalorder %s33, 0
      %p223 = por %p221, %p222
      %p224 = scmp.le.s32.totalorder 1, %s27
      %p225 = scmp.lt.s32.totalorder %s27, 3
      %p226 = pnand %p224, %p225
      %p227 = pneg %p226
      // Predicated region
      $region9: #{tpu_custom_call.1} parent=5 // pred_check
        _
      $region10: #{tpu_custom_call.1} parent=5 // pred_check_branch
        %229 = sbr.rel (%p226) target = $region12
      $region11: #{tpu_custom_call.1} parent=5 // pred_region
        %s230 = ssub.s32 %s27, 1
        // Predicated region
        $region13: #{tpu_custom_call.1} parent=11 // pred_check
          %p231 = pneg %p148
        $region14: #{tpu_custom_call.1} parent=11 // pred_check_branch
          %233 = sbr.rel (%p231) target = $region16
        $region15: #{tpu_custom_call.1} parent=11 // pred_region
          _
        $region16: #{tpu_custom_call.1} parent=11 // pred_fallthru
          _
        // Predicated region
        $region17: #{tpu_custom_call.1} parent=11 // pred_check
          %p234 = pneg %p169
        $region18: #{tpu_custom_call.1} parent=11 // pred_check_branch
          %236 = sbr.rel (%p234) target = $region20
        $region19: #{tpu_custom_call.1} parent=11 // pred_region
          _
        $region20: #{tpu_custom_call.1} parent=11 // pred_fallthru
          _
        // Predicated region
        $region21: #{tpu_custom_call.1} parent=11 // pred_check
          %p237 = pneg %p190
        $region22: #{tpu_custom_call.1} parent=11 // pred_check_branch
          %239 = sbr.rel (%p237) target = $region24
        $region23: #{tpu_custom_call.1} parent=11 // pred_region
          _
        $region24: #{tpu_custom_call.1} parent=11 // pred_fallthru
          _
      $region12: #{tpu_custom_call.1} parent=5 // pred_fallthru
        _
      %p240 = scmp.lt.s32.totalorder %s27, 2
      // Predicated region
      $region25: #{tpu_custom_call.1} parent=5 // pred_check
        %p241 = pneg %p240
      $region26: #{tpu_custom_call.1} parent=5 // pred_check_branch
        %243 = sbr.rel (%p241) target = $region28
      $region27: #{tpu_custom_call.1} parent=5 // pred_region
        // Predicated region
        $region29: #{tpu_custom_call.1} parent=27 // pred_check
          %p244 = pneg %p65
        $region30: #{tpu_custom_call.1} parent=27 // pred_check_branch
          %246 = sbr.rel (%p244) target = $region32
        $region31: #{tpu_custom_call.1} parent=27 // pred_region
          %s247 = sadd.s32 %s34, %s35
          %s248 = sld [smem:[#allocation4 + %s247]]
          %s249 = smul.u32 16, %s34
          %s250 = smul.u32 2, %s248
          %p251 = scmp.lt.s32.totalorder %s249, 31
          %s252 = scalar_select %p251, %s249, 31
          %p253 = scmp.lt.s32.totalorder %s250, 1
          %s254 = scalar_select %p253, %s250, 1
          %s255 = smul.addr %s252, 2
          %s256 = sadd.s32 %s254, %s255
          %s257 = smul.addr %s256, 4
          %s258 = scalar_lea.vmem %s2, %s257
          %s259 = sadd.s32 %s34, %s35
          %s260 = sld [smem:[#allocation4 + %s259]]
          %s261 = smul.u32 16, %s34
          %s262 = smul.u32 2, %s260
        $region32: #{tpu_custom_call.1} parent=27 // pred_fallthru
          _
        // Predicated region
        $region33: #{tpu_custom_call.1} parent=27 // pred_check
          %p263 = pneg %p95
        $region34: #{tpu_custom_call.1} parent=27 // pred_check_branch
          %265 = sbr.rel (%p263) target = $region36
        $region35: #{tpu_custom_call.1} parent=27 // pred_region
          %s266 = sadd.s32 %s34, %s35
          %s267 = sld [smem:[#allocation4 + %s266]]
          %s268 = smul.u32 32, %s267
          %p269 = scmp.lt.s32.totalorder %s268, 31
          %s270 = scalar_select %p269, %s268, 31
          %s271 = smul.addr %s270, 4
          %s272 = scalar_lea.vmem %s3, %s271
          %s273 = sadd.s32 %s34, %s35
          %s274 = sld [smem:[#allocation4 + %s273]]
          %s275 = smul.u32 32, %s274
        $region36: #{tpu_custom_call.1} parent=27 // pred_fallthru
          _
        // Predicated region
        $region37: #{tpu_custom_call.1} parent=27 // pred_check
          %p276 = pneg %p121
        $region38: #{tpu_custom_call.1} parent=27 // pred_check_branch
          %278 = sbr.rel (%p276) target = $region40
        $region39: #{tpu_custom_call.1} parent=27 // pred_region
          %s279 = smul.u32 16, %s34
          %p280 = scmp.lt.s32.totalorder %s279, 31
          %s281 = scalar_select %p280, %s279, 31
          %s282 = smul.addr %s281, 8
          %s283 = scalar_lea.vmem %s4, %s282
          %s284 = smul.u32 16, %s34
        $region40: #{tpu_custom_call.1} parent=27 // pred_fallthru
          _
      $region28: #{tpu_custom_call.1} parent=5 // pred_fallthru
        _
      %p285 = scmp.le.s32.totalorder 1, %s27
      %p286 = scmp.lt.s32.totalorder %s27, 3
      %p287 = pnand %p285, %p286
      %p288 = pneg %p287
      // Predicated region
      $region41: #{tpu_custom_call.1} parent=5 // pred_check
        _
      $region42: #{tpu_custom_call.1} parent=5 // pred_check_branch
        %290 = sbr.rel (%p287) target = $region44
      $region43: #{tpu_custom_call.1} parent=5 // pred_region
        %s291 = ssub.s32 %s27, 1
        %s292 = sadd.s32 %s36, %s37
        %s293 = sld [smem:[#allocation4 + %s292]]
        %s294 = smul.u32 16, %s36
        %s295 = smul.u32 2, %s293
        %p296 = scmp.lt.s32.totalorder %s294, 31
        %s297 = scalar_select %p296, %s294, 31
        %p298 = scmp.lt.s32.totalorder %s295, 1
        %s299 = scalar_select %p298, %s295, 1
        %s300 = smul.addr %s297, 2
        %s301 = sadd.s32 %s299, %s300
        %s302 = smul.addr %s301, 4
        %s303 = scalar_lea.vmem %s2, %s302
        %p304 = pneg %p71
        %p305 = pneg %p68
        %s306 = sadd.s32 %s36, %s37
        %s307 = sld [smem:[#allocation4 + %s306]]
        %s308 = smul.u32 32, %s307
        %p309 = scmp.lt.s32.totalorder %s308, 31
        %s310 = scalar_select %p309, %s308, 31
        %s311 = smul.addr %s310, 4
        %s312 = scalar_lea.vmem %s3, %s311
        %p313 = pneg %p101
        %p314 = pneg %p98
        %s315 = smul.u32 16, %s36
        %p316 = scmp.lt.s32.totalorder %s315, 31
        %s317 = scalar_select %p316, %s315, 31
        %s318 = smul.addr %s317, 8
        %s319 = scalar_lea.vmem %s4, %s318
        %p320 = pneg %p127
        %p321 = pneg %p124
        %p322 = pneg %p148
        %p323 = pneg %p145
        %p324 = pneg %p169
        %p325 = pneg %p166
        %p326 = pneg %p190
        %p327 = pneg %p187
        %p328 = pneg %p216
        %p329 = pneg %p213
        %s330 = sand.u32 %s203, 1
        %s331 = scalar_lea.sflag [#allocation7], %s330
        %s332 = sand.u32 %s203, 1
        %s333 = smul.addr %s332, 128
        %s334 = scalar_lea.vmem [#allocation6], %s333
        %s335 = sadd.s32 %s36, %s37
        %s336 = sld [smem:[#allocation4 + %s335]]
        %s337 = smul.u32 16, %s36
        %s338 = smul.u32 2, %s336
        %p339 = scmp.lt.s32.totalorder %s337, 31
        %s340 = scalar_select %p339, %s337, 31
        %p341 = scmp.lt.s32.totalorder %s338, 1
        %s342 = scalar_select %p341, %s338, 1
        %s343 = smul.addr %s340, 2
        %s344 = sadd.s32 %s342, %s343
        %s345 = smul.addr %s344, 4
        %s346 = scalar_lea.vmem %s2, %s345
        %s347 = sadd.s32 %s36, %s37
        %s348 = sld [smem:[#allocation4 + %s347]]
        %s349 = smul.u32 16, %s36
        %s350 = smul.u32 2, %s348
        %s351 = sadd.s32 %s36, %s37
        %s352 = sld [smem:[#allocation4 + %s351]]
        %s353 = smul.u32 32, %s352
        %p354 = scmp.lt.s32.totalorder %s353, 31
        %s355 = scalar_select %p354, %s353, 31
        %s356 = smul.addr %s355, 4
        %s357 = scalar_lea.vmem %s3, %s356
        %s358 = sadd.s32 %s36, %s37
        %s359 = sld [smem:[#allocation4 + %s358]]
        %s360 = smul.u32 32, %s359
        %s361 = smul.u32 16, %s36
        %p362 = scmp.lt.s32.totalorder %s361, 31
        %s363 = scalar_select %p362, %s361, 31
        %s364 = smul.addr %s363, 8
        %s365 = scalar_lea.vmem %s4, %s364
        %s366 = smul.u32 16, %s36
        %s367 = smul.u32 16, %s36
        %p369 = scmp.eq.s32.totalorder %s37, 0
        // Predicated region
        $region45: #{tpu_custom_call.1} parent=43 // pred_check
          %p370 = pneg %p369
        $region46: #{tpu_custom_call.1} parent=43 // pred_check_branch
          %372 = sbr.rel (%p370) target = $region48
        $region47: #{tpu_custom_call.1} parent=43 // pred_region
          %vm373 = vcmask 523264
          %374 = vst.msk [vmem:[#allocation2] sm:$0xff] %vm373, 0.0
          %375 = vst.msk [vmem:[#allocation2 + $0x8] sm:$0xff] %vm373, 0.0
          %376 = vst.msk [vmem:[#allocation2 + $0x10] sm:$0xff] %vm373, 0.0
          %377 = vst.msk [vmem:[#allocation2 + $0x18] sm:$0xff] %vm373, 0.0
          %378 = vst.msk [vmem:[#allocation2 + $0x20] sm:$0xff] %vm373, 0.0
          %379 = vst.msk [vmem:[#allocation2 + $0x28] sm:$0xff] %vm373, 0.0
          %380 = vst.msk [vmem:[#allocation2 + $0x30] sm:$0xff] %vm373, 0.0
          %381 = vst.msk [vmem:[#allocation2 + $0x38] sm:$0xff] %vm373, 0.0
          %382 = vst.msk [vmem:[#allocation2 + $0x40] sm:$0xff] %vm373, 0.0
          %383 = vst.msk [vmem:[#allocation2 + $0x48] sm:$0xff] %vm373, 0.0
          %384 = vst.msk [vmem:[#allocation2 + $0x50] sm:$0xff] %vm373, 0.0
          %385 = vst.msk [vmem:[#allocation2 + $0x58] sm:$0xff] %vm373, 0.0
          %386 = vst.msk [vmem:[#allocation2 + $0x60] sm:$0xff] %vm373, 0.0
          %387 = vst.msk [vmem:[#allocation2 + $0x68] sm:$0xff] %vm373, 0.0
          %388 = vst.msk [vmem:[#allocation2 + $0x70] sm:$0xff] %vm373, 0.0
          %389 = vst.msk [vmem:[#allocation2 + $0x78] sm:$0xff] %vm373, 0.0
        $region48: #{tpu_custom_call.1} parent=43 // pred_fallthru
          _
        %s390 = sadd.s32 %s36, %s37
        %s391 = sld [smem:[#allocation5 + %s390]]
        %p392 = scmp.ne.s32.totalorder %s391, 0
        // Predicated region
        $region49: #{tpu_custom_call.1} parent=43 // pred_check
          %p393 = pneg %p392
        $region50: #{tpu_custom_call.1} parent=43 // pred_check_branch
          %395 = sbr.rel (%p393) target = $region52
        $region51: #{tpu_custom_call.1} parent=43 // pred_region
          %v396 = vld [vmem:[#allocation2] sm:$0xff]
          %v397 = vld [vmem:[#allocation2 + $0x8] sm:$0xff]
          %v398 = vld [vmem:[#allocation2 + $0x10] sm:$0xff]
          %v399 = vld [vmem:[#allocation2 + $0x18] sm:$0xff]
          %v400 = vld [vmem:[#allocation2 + $0x20] sm:$0xff]
          %v401 = vld [vmem:[#allocation2 + $0x28] sm:$0xff]
          %v402 = vld [vmem:[#allocation2 + $0x30] sm:$0xff]
          %v403 = vld [vmem:[#allocation2 + $0x38] sm:$0xff]
          %v404 = vld [vmem:[#allocation2 + $0x40] sm:$0xff]
          %v405 = vld [vmem:[#allocation2 + $0x48] sm:$0xff]
          %v406 = vld [vmem:[#allocation2 + $0x50] sm:$0xff]
          %v407 = vld [vmem:[#allocation2 + $0x58] sm:$0xff]
          %v408 = vld [vmem:[#allocation2 + $0x60] sm:$0xff]
          %v409 = vld [vmem:[#allocation2 + $0x68] sm:$0xff]
          %v410 = vld [vmem:[#allocation2 + $0x70] sm:$0xff]
          %v411 = vld [vmem:[#allocation2 + $0x78] sm:$0xff]
          %v412 = vld [vmem:[%s346] sm:$0xff]
          %v413 = vld [vmem:[%s346 + $0x8] sm:$0xff]
          %v414 = vld [vmem:[%s346 + $0x10] sm:$0xff]
          %v415 = vld [vmem:[%s346 + $0x18] sm:$0xff]
          %v416 = vld [vmem:[%s346 + $0x20] sm:$0xff]
          %v417 = vld [vmem:[%s346 + $0x28] sm:$0xff]
          %v418 = vld [vmem:[%s346 + $0x30] sm:$0xff]
          %v419 = vld [vmem:[%s346 + $0x38] sm:$0xff]
          %v420 = vld [vmem:[%s346 + $0x40] sm:$0xff]
          %v421 = vld [vmem:[%s346 + $0x48] sm:$0xff]
          %v422 = vld [vmem:[%s346 + $0x50] sm:$0xff]
          %v423 = vld [vmem:[%s346 + $0x58] sm:$0xff]
          %v424 = vld [vmem:[%s346 + $0x60] sm:$0xff]
          %v425 = vld [vmem:[%s346 + $0x68] sm:$0xff]
          %v426 = vld [vmem:[%s346 + $0x70] sm:$0xff]
          %v427 = vld [vmem:[%s346 + $0x78] sm:$0xff]
          %v428 = vld [vmem:[%s357] sm:$0xf]
          %v429 = vld [vmem:[%s357 + $0x4] sm:$0xf]
          %v430 = vld [vmem:[%s357 + $0x8] sm:$0xf]
          %v431 = vld [vmem:[%s357 + $0xc] sm:$0xf]
          %v432 = vld [vmem:[%s357 + $0x10] sm:$0xf]
          %v433 = vld [vmem:[%s357 + $0x14] sm:$0xf]
          %v434 = vld [vmem:[%s357 + $0x18] sm:$0xf]
          %v435 = vld [vmem:[%s357 + $0x1c] sm:$0xf]
          %v436 = vld [vmem:[%s357 + $0x20] sm:$0xf]
          %v437 = vld [vmem:[%s357 + $0x24] sm:$0xf]
          %v438 = vld [vmem:[%s357 + $0x28] sm:$0xf]
          %v439 = vld [vmem:[%s357 + $0x2c] sm:$0xf]
          %v440 = vld [vmem:[%s357 + $0x30] sm:$0xf]
          %v441 = vld [vmem:[%s357 + $0x34] sm:$0xf]
          %v442 = vld [vmem:[%s357 + $0x38] sm:$0xf]
          %v443 = vld [vmem:[%s357 + $0x3c] sm:$0xf]
          %v444 = vld [vmem:[%s357 + $0x40] sm:$0xf]
          %v445 = vld [vmem:[%s357 + $0x44] sm:$0xf]
          %v446 = vld [vmem:[%s357 + $0x48] sm:$0xf]
          %v447 = vld [vmem:[%s357 + $0x4c] sm:$0xf]
          %v448 = vld [vmem:[%s357 + $0x50] sm:$0xf]
          %v449 = vld [vmem:[%s357 + $0x54] sm:$0xf]
          %v450 = vld [vmem:[%s357 + $0x58] sm:$0xf]
          %v451 = vld [vmem:[%s357 + $0x5c] sm:$0xf]
          %v452 = vld [vmem:[%s357 + $0x60] sm:$0xf]
          %v453 = vld [vmem:[%s357 + $0x64] sm:$0xf]
          %v454 = vld [vmem:[%s357 + $0x68] sm:$0xf]
          %v455 = vld [vmem:[%s357 + $0x6c] sm:$0xf]
          %v456 = vld [vmem:[%s357 + $0x70] sm:$0xf]
          %v457 = vld [vmem:[%s357 + $0x74] sm:$0xf]
          %v458 = vld [vmem:[%s357 + $0x78] sm:$0xf]
          %v459 = vld [vmem:[%s357 + $0x7c] sm:$0xf]
          %v476 = vunpack.c.l.b16 %v412
          %v477 = vunpack.c.h.b16 %v412
          %v478 = vunpack.c.l.b16 %v413
          %v479 = vunpack.c.h.b16 %v413
          %v480 = vunpack.c.l.b16 %v414
          %v481 = vunpack.c.h.b16 %v414
          %v482 = vunpack.c.l.b16 %v415
          %v483 = vunpack.c.h.b16 %v415
          %v484 = vunpack.c.l.b16 %v416
          %v485 = vunpack.c.h.b16 %v416
          %v486 = vunpack.c.l.b16 %v417
          %v487 = vunpack.c.h.b16 %v417
          %v488 = vunpack.c.l.b16 %v418
          %v489 = vunpack.c.h.b16 %v418
          %v490 = vunpack.c.l.b16 %v419
          %v491 = vunpack.c.h.b16 %v419
          %v492 = vunpack.c.l.b16 %v420
          %v493 = vunpack.c.h.b16 %v420
          %v494 = vunpack.c.l.b16 %v421
          %v495 = vunpack.c.h.b16 %v421
          %v496 = vunpack.c.l.b16 %v422
          %v497 = vunpack.c.h.b16 %v422
          %v498 = vunpack.c.l.b16 %v423
          %v499 = vunpack.c.h.b16 %v423
          %v500 = vunpack.c.l.b16 %v424
          %v501 = vunpack.c.h.b16 %v424
          %v502 = vunpack.c.l.b16 %v425
          %v503 = vunpack.c.h.b16 %v425
          %v504 = vunpack.c.l.b16 %v426
          %v505 = vunpack.c.h.b16 %v426
          %v506 = vunpack.c.l.b16 %v427
          %v507 = vunpack.c.h.b16 %v427
          %v508 = vpack.c.b16 %v478, %v476
          %v509 = vpack.c.b16 %v479, %v477
          %v510 = vpack.c.b16 %v482, %v480
          %v511 = vpack.c.b16 %v483, %v481
          %v512 = vpack.c.b16 %v486, %v484
          %v513 = vpack.c.b16 %v487, %v485
          %v514 = vpack.c.b16 %v490, %v488
          %v515 = vpack.c.b16 %v491, %v489
          %v516 = vpack.c.b16 %v494, %v492
          %v517 = vpack.c.b16 %v495, %v493
          %v518 = vpack.c.b16 %v498, %v496
          %v519 = vpack.c.b16 %v499, %v497
          %v520 = vpack.c.b16 %v502, %v500
          %v521 = vpack.c.b16 %v503, %v501
          %v522 = vpack.c.b16 %v506, %v504
          %v523 = vpack.c.b16 %v507, %v505
          %v572 = vunpack.c.l.b16 %v428
          %v573 = vunpack.c.l.b16 %v429
          %v574 = vunpack.c.l.b16 %v430
          %v575 = vunpack.c.l.b16 %v431
          %v576 = vunpack.c.l.b16 %v432
          %v577 = vunpack.c.l.b16 %v433
          %v578 = vunpack.c.l.b16 %v434
          %v579 = vunpack.c.l.b16 %v435
          %v580 = vunpack.c.l.b16 %v436
          %v581 = vunpack.c.l.b16 %v437
          %v582 = vunpack.c.l.b16 %v438
          %v583 = vunpack.c.l.b16 %v439
          %v584 = vunpack.c.l.b16 %v440
          %v585 = vunpack.c.l.b16 %v441
          %v586 = vunpack.c.l.b16 %v442
          %v587 = vunpack.c.l.b16 %v443
          %v588 = vunpack.c.l.b16 %v444
          %v589 = vunpack.c.l.b16 %v445
          %v590 = vunpack.c.l.b16 %v446
          %v591 = vunpack.c.l.b16 %v447
          %v592 = vunpack.c.l.b16 %v448
          %v593 = vunpack.c.l.b16 %v449
          %v594 = vunpack.c.l.b16 %v450
          %v595 = vunpack.c.l.b16 %v451
          %v596 = vunpack.c.l.b16 %v452
          %v597 = vunpack.c.l.b16 %v453
          %v598 = vunpack.c.l.b16 %v454
          %v599 = vunpack.c.l.b16 %v455
          %v600 = vunpack.c.l.b16 %v456
          %v601 = vunpack.c.l.b16 %v457
          %v602 = vunpack.c.l.b16 %v458
          %v603 = vunpack.c.l.b16 %v459
          %v604 = vpack.c.b16 %v573, %v572
          %v605 = vpack.c.b16 %v575, %v574
          %v606 = vpack.c.b16 %v577, %v576
          %v607 = vpack.c.b16 %v579, %v578
          %v608 = vpack.c.b16 %v581, %v580
          %v609 = vpack.c.b16 %v583, %v582
          %v610 = vpack.c.b16 %v585, %v584
          %v611 = vpack.c.b16 %v587, %v586
          %v612 = vpack.c.b16 %v589, %v588
          %v613 = vpack.c.b16 %v591, %v590
          %v614 = vpack.c.b16 %v593, %v592
          %v615 = vpack.c.b16 %v595, %v594
          %v616 = vpack.c.b16 %v597, %v596
          %v617 = vpack.c.b16 %v599, %v598
          %v618 = vpack.c.b16 %v601, %v600
          %v619 = vpack.c.b16 %v603, %v602
          %636 = vmatprep.subr.bf16.mxu0 0
          %637 = vmatpush1.bf16.msra.mxu0 %v604
          %638 = vmatprep.subr.bf16.mxu0 0
          %639 = vmatpush1.bf16.msra.mxu0 %v605
          %640 = vmatprep.subr.bf16.mxu0 0
          %641 = vmatpush1.bf16.msra.mxu0 %v606
          %642 = vmatprep.subr.bf16.mxu0 0
          %643 = vmatpush1.bf16.msra.mxu0 %v607
          %644 = vmatprep.subr.bf16.mxu0 0
          %645 = vmatpush1.bf16.msra.mxu0 %v608
          %646 = vmatprep.subr.bf16.mxu0 0
          %647 = vmatpush1.bf16.msra.mxu0 %v609
          %648 = vmatprep.subr.bf16.mxu0 0
          %649 = vmatpush1.bf16.msra.mxu0 %v610
          %650 = vmatprep.subr.bf16.mxu0 0
          %651 = vmatpush1.bf16.msra.mxu0 %v611
          %652 = vmatprep.subr.bf16.mxu0 0
          %653 = vmatpush1.bf16.msra.mxu0 %v612
          %654 = vmatprep.subr.bf16.mxu0 0
          %655 = vmatpush1.bf16.msra.mxu0 %v613
          %656 = vmatprep.subr.bf16.mxu0 0
          %657 = vmatpush1.bf16.msra.mxu0 %v614
          %658 = vmatprep.subr.bf16.mxu0 0
          %659 = vmatpush1.bf16.msra.mxu0 %v615
          %660 = vmatprep.subr.bf16.mxu0 0
          %661 = vmatpush1.bf16.msra.mxu0 %v616
          %662 = vmatprep.subr.bf16.mxu0 0
          %663 = vmatpush1.bf16.msra.mxu0 %v617
          %664 = vmatprep.subr.bf16.mxu0 0
          %665 = vmatpush1.bf16.msra.mxu0 %v618
          %666 = vmatprep.subr.bf16.mxu0 0
          %667 = vmatpush1.bf16.msra.mxu0 %v619
          %668 = vmatprep.mubr.bf16.mxu0 %v509
          %669 = vmatmul.mubr.bf16.gmra.mrb[0].mxu0 %v508
          %v670 = vpop.f32.mrb[0].mxu0
          %v671 = vadd.f32 0.0, %v670
          %v672 = vpop.f32.mrb[0].mxu0
          %v673 = vpop.f32.mrb[0].mxu0
          %v674 = vadd.f32 0.0, %v673
          %v675 = vpop.f32.mrb[0].mxu0
          %676 = vmatprep.mubr.bf16.mxu0 %v511
          %677 = vmatmul.mubr.bf16.gmra.mrb[0].mxu0 %v510
          %v678 = vpop.f32.mrb[0].mxu0
          %v679 = vadd.f32 0.0, %v678
          %v680 = vpop.f32.mrb[0].mxu0
          %v681 = vpop.f32.mrb[0].mxu0
          %v682 = vadd.f32 0.0, %v681
          %v683 = vpop.f32.mrb[0].mxu0
          %684 = vmatprep.mubr.bf16.mxu0 %v513
          %685 = vmatmul.mubr.bf16.gmra.mrb[0].mxu0 %v512
          %v686 = vpop.f32.mrb[0].mxu0
          %v687 = vadd.f32 0.0, %v686
          %v688 = vpop.f32.mrb[0].mxu0
          %v689 = vpop.f32.mrb[0].mxu0
          %v690 = vadd.f32 0.0, %v689
          %v691 = vpop.f32.mrb[0].mxu0
          %692 = vmatprep.mubr.bf16.mxu0 %v515
          %693 = vmatmul.mubr.bf16.gmra.mrb[0].mxu0 %v514
          %v694 = vpop.f32.mrb[0].mxu0
          %v695 = vadd.f32 0.0, %v694
          %v696 = vpop.f32.mrb[0].mxu0
          %v697 = vpop.f32.mrb[0].mxu0
          %v698 = vadd.f32 0.0, %v697
          %v699 = vpop.f32.mrb[0].mxu0
          %700 = vmatprep.mubr.bf16.mxu0 %v517
          %701 = vmatmul.mubr.bf16.gmra.mrb[0].mxu0 %v516
          %v702 = vpop.f32.mrb[0].mxu0
          %v703 = vadd.f32 0.0, %v702
          %v704 = vpop.f32.mrb[0].mxu0
          %v705 = vpop.f32.mrb[0].mxu0
          %v706 = vadd.f32 0.0, %v705
          %v707 = vpop.f32.mrb[0].mxu0
          %708 = vmatprep.mubr.bf16.mxu0 %v519
          %709 = vmatmul.mubr.bf16.gmra.mrb[0].mxu0 %v518
          %v710 = vpop.f32.mrb[0].mxu0
          %v711 = vadd.f32 0.0, %v710
          %v712 = vpop.f32.mrb[0].mxu0
          %v713 = vpop.f32.mrb[0].mxu0
          %v714 = vadd.f32 0.0, %v713
          %v715 = vpop.f32.mrb[0].mxu0
          %716 = vmatprep.mubr.bf16.mxu0 %v521
          %717 = vmatmul.mubr.bf16.gmra.mrb[0].mxu0 %v520
          %v718 = vpop.f32.mrb[0].mxu0
          %v719 = vadd.f32 0.0, %v718
          %v720 = vpop.f32.mrb[0].mxu0
          %v721 = vpop.f32.mrb[0].mxu0
          %v722 = vadd.f32 0.0, %v721
          %v723 = vpop.f32.mrb[0].mxu0
          %724 = vmatprep.mubr.bf16.mxu0 %v523
          %725 = vmatmul.mubr.bf16.gmra.mrb[0].mxu0 %v522
          %v726 = vpop.f32.mrb[0].mxu0
          %v727 = vadd.f32 0.0, %v726
          %v728 = vpop.f32.mrb[0].mxu0
          %v729 = vpop.f32.mrb[0].mxu0
          %v730 = vadd.f32 0.0, %v729
          %v731 = vpop.f32.mrb[0].mxu0
          %732 = vdwg.mxu0
          %v733 = vadd.f32 %v396, %v671
          %v734 = vadd.f32 %v397, %v674
          %v735 = vadd.f32 %v398, %v679
          %v736 = vadd.f32 %v399, %v682
          %v737 = vadd.f32 %v400, %v687
          %v738 = vadd.f32 %v401, %v690
          %v739 = vadd.f32 %v402, %v695
          %v740 = vadd.f32 %v403, %v698
          %v741 = vadd.f32 %v404, %v703
          %v742 = vadd.f32 %v405, %v706
          %v743 = vadd.f32 %v406, %v711
          %v744 = vadd.f32 %v407, %v714
          %v745 = vadd.f32 %v408, %v719
          %v746 = vadd.f32 %v409, %v722
          %v747 = vadd.f32 %v410, %v727
          %v748 = vadd.f32 %v411, %v730
          %vm749 = vcmask 523264
          %750 = vst.msk [vmem:[#allocation2] sm:$0xff] %vm749, %v733
          %751 = vst.msk [vmem:[#allocation2 + $0x8] sm:$0xff] %vm749, %v734
          %752 = vst.msk [vmem:[#allocation2 + $0x10] sm:$0xff] %vm749, %v735
          %753 = vst.msk [vmem:[#allocation2 + $0x18] sm:$0xff] %vm749, %v736
          %754 = vst.msk [vmem:[#allocation2 + $0x20] sm:$0xff] %vm749, %v737
          %755 = vst.msk [vmem:[#allocation2 + $0x28] sm:$0xff] %vm749, %v738
          %756 = vst.msk [vmem:[#allocation2 + $0x30] sm:$0xff] %vm749, %v739
          %757 = vst.msk [vmem:[#allocation2 + $0x38] sm:$0xff] %vm749, %v740
          %758 = vst.msk [vmem:[#allocation2 + $0x40] sm:$0xff] %vm749, %v741
          %759 = vst.msk [vmem:[#allocation2 + $0x48] sm:$0xff] %vm749, %v742
          %760 = vst.msk [vmem:[#allocation2 + $0x50] sm:$0xff] %vm749, %v743
          %761 = vst.msk [vmem:[#allocation2 + $0x58] sm:$0xff] %vm749, %v744
          %762 = vst.msk [vmem:[#allocation2 + $0x60] sm:$0xff] %vm749, %v745
          %763 = vst.msk [vmem:[#allocation2 + $0x68] sm:$0xff] %vm749, %v746
          %764 = vst.msk [vmem:[#allocation2 + $0x70] sm:$0xff] %vm749, %v747
          %765 = vst.msk [vmem:[#allocation2 + $0x78] sm:$0xff] %vm749, %v748
        $region52: #{tpu_custom_call.1} parent=43 // pred_fallthru
          _
        // Predicated region
        $region53: #{tpu_custom_call.1} parent=43 // pred_check
          %p766 = pneg %p369
        $region54: #{tpu_custom_call.1} parent=43 // pred_check_branch
          %768 = sbr.rel (%p766) target = $region56
        $region55: #{tpu_custom_call.1} parent=43 // pred_region
          %v769 = vld [vmem:[#allocation2] sm:$0xff]
          %v770 = vld [vmem:[#allocation2 + $0x8] sm:$0xff]
          %v771 = vld [vmem:[#allocation2 + $0x10] sm:$0xff]
          %v772 = vld [vmem:[#allocation2 + $0x18] sm:$0xff]
          %v773 = vld [vmem:[#allocation2 + $0x20] sm:$0xff]
          %v774 = vld [vmem:[#allocation2 + $0x28] sm:$0xff]
          %v775 = vld [vmem:[#allocation2 + $0x30] sm:$0xff]
          %v776 = vld [vmem:[#allocation2 + $0x38] sm:$0xff]
          %v777 = vld [vmem:[#allocation2 + $0x40] sm:$0xff]
          %v778 = vld [vmem:[#allocation2 + $0x48] sm:$0xff]
          %v779 = vld [vmem:[#allocation2 + $0x50] sm:$0xff]
          %v780 = vld [vmem:[#allocation2 + $0x58] sm:$0xff]
          %v781 = vld [vmem:[#allocation2 + $0x60] sm:$0xff]
          %v782 = vld [vmem:[#allocation2 + $0x68] sm:$0xff]
          %v783 = vld [vmem:[#allocation2 + $0x70] sm:$0xff]
          %v784 = vld [vmem:[#allocation2 + $0x78] sm:$0xff]
          %v785 = vld [vmem:[%s365] sm:$0xff]
          %v786 = vld [vmem:[%s365 + $0x8] sm:$0xff]
          %v787 = vld [vmem:[%s365 + $0x10] sm:$0xff]
          %v788 = vld [vmem:[%s365 + $0x18] sm:$0xff]
          %v789 = vld [vmem:[%s365 + $0x20] sm:$0xff]
          %v790 = vld [vmem:[%s365 + $0x28] sm:$0xff]
          %v791 = vld [vmem:[%s365 + $0x30] sm:$0xff]
          %v792 = vld [vmem:[%s365 + $0x38] sm:$0xff]
          %v793 = vld [vmem:[%s365 + $0x40] sm:$0xff]
          %v794 = vld [vmem:[%s365 + $0x48] sm:$0xff]
          %v795 = vld [vmem:[%s365 + $0x50] sm:$0xff]
          %v796 = vld [vmem:[%s365 + $0x58] sm:$0xff]
          %v797 = vld [vmem:[%s365 + $0x60] sm:$0xff]
          %v798 = vld [vmem:[%s365 + $0x68] sm:$0xff]
          %v799 = vld [vmem:[%s365 + $0x70] sm:$0xff]
          %v800 = vld [vmem:[%s365 + $0x78] sm:$0xff]
          %v801 = vadd.f32 %v769, %v785
          %v802 = vadd.f32 %v770, %v786
          %v803 = vadd.f32 %v771, %v787
          %v804 = vadd.f32 %v772, %v788
          %v805 = vadd.f32 %v773, %v789
          %v806 = vadd.f32 %v774, %v790
          %v807 = vadd.f32 %v775, %v791
          %v808 = vadd.f32 %v776, %v792
          %v809 = vadd.f32 %v777, %v793
          %v810 = vadd.f32 %v778, %v794
          %v811 = vadd.f32 %v779, %v795
          %v812 = vadd.f32 %v780, %v796
          %v813 = vadd.f32 %v781, %v797
          %v814 = vadd.f32 %v782, %v798
          %v815 = vadd.f32 %v783, %v799
          %v816 = vadd.f32 %v784, %v800
          %v817 = vld [vmem:[%s5] sm:$0xff]
          %v818 = vld [vmem:[%s5 + $0x8] sm:$0xff]
          %v819 = vld [vmem:[%s5 + $0x10] sm:$0xff]
          %v820 = vld [vmem:[%s5 + $0x18] sm:$0xff]
          %v821 = vld [vmem:[%s5 + $0x20] sm:$0xff]
          %v822 = vld [vmem:[%s5 + $0x28] sm:$0xff]
          %v823 = vld [vmem:[%s5 + $0x30] sm:$0xff]
          %v824 = vld [vmem:[%s5 + $0x38] sm:$0xff]
          %v825 = vmul.f32 %v769, %v785
          %v826 = vmul.f32 %v770, %v786
          %v827 = vmul.f32 %v771, %v787
          %v828 = vmul.f32 %v772, %v788
          %v829 = vmul.f32 %v773, %v789
          %v830 = vmul.f32 %v774, %v790
          %v831 = vmul.f32 %v775, %v791
          %v832 = vmul.f32 %v776, %v792
          %v833 = vmul.f32 %v777, %v793
          %v834 = vmul.f32 %v778, %v794
          %v835 = vmul.f32 %v779, %v795
          %v836 = vmul.f32 %v780, %v796
          %v837 = vmul.f32 %v781, %v797
          %v838 = vmul.f32 %v782, %v798
          %v839 = vmul.f32 %v783, %v799
          %v840 = vmul.f32 %v784, %v800
          %v841 = vld [vmem:[%s6] sm:$0xff]
          %v842 = vld [vmem:[%s6 + $0x8] sm:$0xff]
          %v843 = vld [vmem:[%s6 + $0x10] sm:$0xff]
          %v844 = vld [vmem:[%s6 + $0x18] sm:$0xff]
          %v845 = vld [vmem:[%s6 + $0x20] sm:$0xff]
          %v846 = vld [vmem:[%s6 + $0x28] sm:$0xff]
          %v847 = vld [vmem:[%s6 + $0x30] sm:$0xff]
          %v848 = vld [vmem:[%s6 + $0x38] sm:$0xff]
          %vm849 = vcmask 523264
          %v851 = vsel %vm849, %v825, 0
          %v854 = vsel %vm849, %v826, 0
          %v857 = vsel %vm849, %v827, 0
          %v860 = vsel %vm849, %v828, 0
          %v863 = vsel %vm849, %v829, 0
          %v866 = vsel %vm849, %v830, 0
          %v869 = vsel %vm849, %v831, 0
          %v872 = vsel %vm849, %v832, 0
          %v875 = vsel %vm849, %v833, 0
          %v878 = vsel %vm849, %v834, 0
          %v881 = vsel %vm849, %v835, 0
          %v884 = vsel %vm849, %v836, 0
          %v887 = vsel %vm849, %v837, 0
          %v890 = vsel %vm849, %v838, 0
          %v893 = vsel %vm849, %v839, 0
          %v896 = vsel %vm849, %v840, 0
          %898 = vmatprep.subr.mxu0 0.0
          %899 = vmatpush1.msra.mxu0 %v841
          %900 = vmatprep.subr.mxu0 0.0
          %901 = vmatpush1.msra.mxu0 %v842
          %902 = vmatprep.subr.mxu0 0.0
          %903 = vmatpush1.msra.mxu0 %v843
          %904 = vmatprep.subr.mxu0 0.0
          %905 = vmatpush1.msra.mxu0 %v844
          %906 = vmatprep.subr.mxu0 0.0
          %907 = vmatpush1.msra.mxu0 %v845
          %908 = vmatprep.subr.mxu0 0.0
          %909 = vmatpush1.msra.mxu0 %v846
          %910 = vmatprep.subr.mxu0 0.0
          %911 = vmatpush1.msra.mxu0 %v847
          %912 = vmatprep.subr.mxu0 0.0
          %913 = vmatpush1.msra.mxu0 %v848
          %914 = vmatprep.subr.mxu0 0.0
          %915 = vmatpush1.msra.mxu0 0.0
          %916 = vmatprep.subr.mxu0 0.0
          %917 = vmatpush1.msra.mxu0 0.0
          %918 = vmatprep.subr.mxu0 0.0
          %919 = vmatpush1.msra.mxu0 0.0
          %920 = vmatprep.subr.mxu0 0.0
          %921 = vmatpush1.msra.mxu0 0.0
          %922 = vmatprep.subr.mxu0 0.0
          %923 = vmatpush1.msra.mxu0 0.0
          %924 = vmatprep.subr.mxu0 0.0
          %925 = vmatpush1.msra.mxu0 0.0
          %926 = vmatprep.subr.mxu0 0.0
          %927 = vmatpush1.msra.mxu0 0.0
          %928 = vmatprep.subr.mxu0 0.0
          %929 = vmatpush1.msra.mxu0 0.0
          %930 = vmatprep.subr.mxu0 0.0
          %931 = vmatpush1.msra.mxu0 0.0
          %932 = vmatprep.subr.mxu0 0.0
          %933 = vmatpush1.msra.mxu0 0.0
          %934 = vmatprep.subr.mxu0 0.0
          %935 = vmatpush1.msra.mxu0 0.0
          %936 = vmatprep.subr.mxu0 0.0
          %937 = vmatpush1.msra.mxu0 0.0
          %938 = vmatprep.subr.mxu0 0.0
          %939 = vmatpush1.msra.mxu0 0.0
          %940 = vmatprep.subr.mxu0 0.0
          %941 = vmatpush1.msra.mxu0 0.0
          %942 = vmatprep.subr.mxu0 0.0
          %943 = vmatpush1.msra.mxu0 0.0
          %944 = vmatprep.subr.mxu0 0.0
          %945 = vmatpush1.msra.mxu0 0.0
          %946 = vmatprep.subr.mxu0 0.0
          %947 = vmatpush1.msra.mxu0 0.0
          %948 = vmatprep.subr.mxu0 0.0
          %949 = vmatpush1.msra.mxu0 0.0
          %950 = vmatprep.subr.mxu0 0.0
          %951 = vmatpush1.msra.mxu0 0.0
          %952 = vmatprep.subr.mxu0 0.0
          %953 = vmatpush1.msra.mxu0 0.0
          %954 = vmatprep.subr.mxu0 0.0
          %955 = vmatpush1.msra.mxu0 0.0
          %956 = vmatprep.subr.mxu0 0.0
          %957 = vmatpush1.msra.mxu0 0.0
          %958 = vmatprep.subr.mxu0 0.0
          %959 = vmatpush1.msra.mxu0 0.0
          %960 = vmatprep.subr.mxu0 0.0
          %961 = vmatpush1.msra.mxu0 0.0
          %962 = vmatprep.mubr.f32.mxu0 0.0
          %963 = vmatmul.mubr.f32.gmra.mrb[0].mxu0 %v851
          %v964 = vpop.f32.mrb[0].mxu0
          %v965 = vadd.f32 0.0, %v964
          %v966 = vpop.f32.mrb[0].mxu0
          %967 = vmatprep.mubr.f32.mxu0 0.0
          %968 = vmatmul.mubr.f32.gmra.mrb[0].mxu0 %v854
          %v969 = vpop.f32.mrb[0].mxu0
          %v970 = vadd.f32 0.0, %v969
          %v971 = vpop.f32.mrb[0].mxu0
          %972 = vmatprep.mubr.f32.mxu0 0.0
          %973 = vmatmul.mubr.f32.gmra.mrb[0].mxu0 %v857
          %v974 = vpop.f32.mrb[0].mxu0
          %v975 = vadd.f32 0.0, %v974
          %v976 = vpop.f32.mrb[0].mxu0
          %977 = vmatprep.mubr.f32.mxu0 0.0
          %978 = vmatmul.mubr.f32.gmra.mrb[0].mxu0 %v860
          %v979 = vpop.f32.mrb[0].mxu0
          %v980 = vadd.f32 0.0, %v979
          %v981 = vpop.f32.mrb[0].mxu0
          %982 = vmatprep.mubr.f32.mxu0 0.0
          %983 = vmatmul.mubr.f32.gmra.mrb[0].mxu0 %v863
          %v984 = vpop.f32.mrb[0].mxu0
          %v985 = vadd.f32 0.0, %v984
          %v986 = vpop.f32.mrb[0].mxu0
          %987 = vmatprep.mubr.f32.mxu0 0.0
          %988 = vmatmul.mubr.f32.gmra.mrb[0].mxu0 %v866
          %v989 = vpop.f32.mrb[0].mxu0
          %v990 = vadd.f32 0.0, %v989
          %v991 = vpop.f32.mrb[0].mxu0
          %992 = vmatprep.mubr.f32.mxu0 0.0
          %993 = vmatmul.mubr.f32.gmra.mrb[0].mxu0 %v869
          %v994 = vpop.f32.mrb[0].mxu0
          %v995 = vadd.f32 0.0, %v994
          %v996 = vpop.f32.mrb[0].mxu0
          %997 = vmatprep.mubr.f32.mxu0 0.0
          %998 = vmatmul.mubr.f32.gmra.mrb[0].mxu0 %v872
          %v999 = vpop.f32.mrb[0].mxu0
          %v1000 = vadd.f32 0.0, %v999
          %v1001 = vpop.f32.mrb[0].mxu0
          %1002 = vmatprep.mubr.f32.mxu0 0.0
          %1003 = vmatmul.mubr.f32.gmra.mrb[0].mxu0 %v875
          %v1004 = vpop.f32.mrb[0].mxu0
          %v1005 = vadd.f32 0.0, %v1004
          %v1006 = vpop.f32.mrb[0].mxu0
          %1007 = vmatprep.mubr.f32.mxu0 0.0
          %1008 = vmatmul.mubr.f32.gmra.mrb[0].mxu0 %v878
          %v1009 = vpop.f32.mrb[0].mxu0
          %v1010 = vadd.f32 0.0, %v1009
          %v1011 = vpop.f32.mrb[0].mxu0
          %1012 = vmatprep.mubr.f32.mxu0 0.0
          %1013 = vmatmul.mubr.f32.gmra.mrb[0].mxu0 %v881
          %v1014 = vpop.f32.mrb[0].mxu0
          %v1015 = vadd.f32 0.0, %v1014
          %v1016 = vpop.f32.mrb[0].mxu0
          %1017 = vmatprep.mubr.f32.mxu0 0.0
          %1018 = vmatmul.mubr.f32.gmra.mrb[0].mxu0 %v884
          %v1019 = vpop.f32.mrb[0].mxu0
          %v1020 = vadd.f32 0.0, %v1019
          %v1021 = vpop.f32.mrb[0].mxu0
          %1022 = vmatprep.mubr.f32.mxu0 0.0
          %1023 = vmatmul.mubr.f32.gmra.mrb[0].mxu0 %v887
          %v1024 = vpop.f32.mrb[0].mxu0
          %v1025 = vadd.f32 0.0, %v1024
          %v1026 = vpop.f32.mrb[0].mxu0
          %1027 = vmatprep.mubr.f32.mxu0 0.0
          %1028 = vmatmul.mubr.f32.gmra.mrb[0].mxu0 %v890
          %v1029 = vpop.f32.mrb[0].mxu0
          %v1030 = vadd.f32 0.0, %v1029
          %v1031 = vpop.f32.mrb[0].mxu0
          %1032 = vmatprep.mubr.f32.mxu0 0.0
          %1033 = vmatmul.mubr.f32.gmra.mrb[0].mxu0 %v893
          %v1034 = vpop.f32.mrb[0].mxu0
          %v1035 = vadd.f32 0.0, %v1034
          %v1036 = vpop.f32.mrb[0].mxu0
          %1037 = vmatprep.mubr.f32.mxu0 0.0
          %1038 = vmatmul.mubr.f32.gmra.mrb[0].mxu0 %v896
          %v1039 = vpop.f32.mrb[0].mxu0
          %v1040 = vadd.f32 0.0, %v1039
          %v1041 = vpop.f32.mrb[0].mxu0
          %1042 = vdwg.mxu0
          %v1044 = vsel %vm849, %v801, 0
          %v1047 = vsel %vm849, %v802, 0
          %v1050 = vsel %vm849, %v803, 0
          %v1053 = vsel %vm849, %v804, 0
          %v1056 = vsel %vm849, %v805, 0
          %v1059 = vsel %vm849, %v806, 0
          %v1062 = vsel %vm849, %v807, 0
          %v1065 = vsel %vm849, %v808, 0
          %v1068 = vsel %vm849, %v809, 0
          %v1071 = vsel %vm849, %v810, 0
          %v1074 = vsel %vm849, %v811, 0
          %v1077 = vsel %vm849, %v812, 0
          %v1080 = vsel %vm849, %v813, 0
          %v1083 = vsel %vm849, %v814, 0
          %v1086 = vsel %vm849, %v815, 0
          %v1089 = vsel %vm849, %v816, 0
          %1091 = vmatprep.subr.mxu0 0.0
          %1092 = vmatpush1.msra.mxu0 %v817
          %1093 = vmatprep.subr.mxu0 0.0
          %1094 = vmatpush1.msra.mxu0 %v818
          %1095 = vmatprep.subr.mxu0 0.0
          %1096 = vmatpush1.msra.mxu0 %v819
          %1097 = vmatprep.subr.mxu0 0.0
          %1098 = vmatpush1.msra.mxu0 %v820
          %1099 = vmatprep.subr.mxu0 0.0
          %1100 = vmatpush1.msra.mxu0 %v821
          %1101 = vmatprep.subr.mxu0 0.0
          %1102 = vmatpush1.msra.mxu0 %v822
          %1103 = vmatprep.subr.mxu0 0.0
          %1104 = vmatpush1.msra.mxu0 %v823
          %1105 = vmatprep.subr.mxu0 0.0
          %1106 = vmatpush1.msra.mxu0 %v824
          %1107 = vmatprep.subr.mxu0 0.0
          %1108 = vmatpush1.msra.mxu0 0.0
          %1109 = vmatprep.subr.mxu0 0.0
          %1110 = vmatpush1.msra.mxu0 0.0
          %1111 = vmatprep.subr.mxu0 0.0
          %1112 = vmatpush1.msra.mxu0 0.0
          %1113 = vmatprep.subr.mxu0 0.0
          %1114 = vmatpush1.msra.mxu0 0.0
          %1115 = vmatprep.subr.mxu0 0.0
          %1116 = vmatpush1.msra.mxu0 0.0
          %1117 = vmatprep.subr.mxu0 0.0
          %1118 = vmatpush1.msra.mxu0 0.0
          %1119 = vmatprep.subr.mxu0 0.0
          %1120 = vmatpush1.msra.mxu0 0.0
          %1121 = vmatprep.subr.mxu0 0.0
          %1122 = vmatpush1.msra.mxu0 0.0
          %1123 = vmatprep.subr.mxu0 0.0
          %1124 = vmatpush1.msra.mxu0 0.0
          %1125 = vmatprep.subr.mxu0 0.0
          %1126 = vmatpush1.msra.mxu0 0.0
          %1127 = vmatprep.subr.mxu0 0.0
          %1128 = vmatpush1.msra.mxu0 0.0
          %1129 = vmatprep.subr.mxu0 0.0
          %1130 = vmatpush1.msra.mxu0 0.0
          %1131 = vmatprep.subr.mxu0 0.0
          %1132 = vmatpush1.msra.mxu0 0.0
          %1133 = vmatprep.subr.mxu0 0.0
          %1134 = vmatpush1.msra.mxu0 0.0
          %1135 = vmatprep.subr.mxu0 0.0
          %1136 = vmatpush1.msra.mxu0 0.0
          %1137 = vmatprep.subr.mxu0 0.0
          %1138 = vmatpush1.msra.mxu0 0.0
          %1139 = vmatprep.subr.mxu0 0.0
          %1140 = vmatpush1.msra.mxu0 0.0
          %1141 = vmatprep.subr.mxu0 0.0
          %1142 = vmatpush1.msra.mxu0 0.0
          %1143 = vmatprep.subr.mxu0 0.0
          %1144 = vmatpush1.msra.mxu0 0.0
          %1145 = vmatprep.subr.mxu0 0.0
          %1146 = vmatpush1.msra.mxu0 0.0
          %1147 = vmatprep.subr.mxu0 0.0
          %1148 = vmatpush1.msra.mxu0 0.0
          %1149 = vmatprep.subr.mxu0 0.0
          %1150 = vmatpush1.msra.mxu0 0.0
          %1151 = vmatprep.subr.mxu0 0.0
          %1152 = vmatpush1.msra.mxu0 0.0
          %1153 = vmatprep.subr.mxu0 0.0
          %1154 = vmatpush1.msra.mxu0 0.0
          %1155 = vmatprep.mubr.f32.mxu0 0.0
          %1156 = vmatmul.mubr.f32.gmra.mrb[0].mxu0 %v1044
          %v1157 = vpop.f32.mrb[0].mxu0
          %v1158 = vadd.f32 %v965, %v1157
          %v1159 = vpop.f32.mrb[0].mxu0
          %1160 = vmatprep.mubr.f32.mxu0 0.0
          %1161 = vmatmul.mubr.f32.gmra.mrb[0].mxu0 %v1047
          %v1162 = vpop.f32.mrb[0].mxu0
          %v1163 = vadd.f32 %v970, %v1162
          %v1164 = vpop.f32.mrb[0].mxu0
          %1165 = vmatprep.mubr.f32.mxu0 0.0
          %1166 = vmatmul.mubr.f32.gmra.mrb[0].mxu0 %v1050
          %v1167 = vpop.f32.mrb[0].mxu0
          %v1168 = vadd.f32 %v975, %v1167
          %v1169 = vpop.f32.mrb[0].mxu0
          %1170 = vmatprep.mubr.f32.mxu0 0.0
          %1171 = vmatmul.mubr.f32.gmra.mrb[0].mxu0 %v1053
          %v1172 = vpop.f32.mrb[0].mxu0
          %v1173 = vadd.f32 %v980, %v1172
          %v1174 = vpop.f32.mrb[0].mxu0
          %1175 = vmatprep.mubr.f32.mxu0 0.0
          %1176 = vmatmul.mubr.f32.gmra.mrb[0].mxu0 %v1056
          %v1177 = vpop.f32.mrb[0].mxu0
          %v1178 = vadd.f32 %v985, %v1177
          %v1179 = vpop.f32.mrb[0].mxu0
          %1180 = vmatprep.mubr.f32.mxu0 0.0
          %1181 = vmatmul.mubr.f32.gmra.mrb[0].mxu0 %v1059
          %v1182 = vpop.f32.mrb[0].mxu0
          %v1183 = vadd.f32 %v990, %v1182
          %v1184 = vpop.f32.mrb[0].mxu0
          %1185 = vmatprep.mubr.f32.mxu0 0.0
          %1186 = vmatmul.mubr.f32.gmra.mrb[0].mxu0 %v1062
          %v1187 = vpop.f32.mrb[0].mxu0
          %v1188 = vadd.f32 %v995, %v1187
          %v1189 = vpop.f32.mrb[0].mxu0
          %1190 = vmatprep.mubr.f32.mxu0 0.0
          %1191 = vmatmul.mubr.f32.gmra.mrb[0].mxu0 %v1065
          %v1192 = vpop.f32.mrb[0].mxu0
          %v1193 = vadd.f32 %v1000, %v1192
          %v1194 = vpop.f32.mrb[0].mxu0
          %1195 = vmatprep.mubr.f32.mxu0 0.0
          %1196 = vmatmul.mubr.f32.gmra.mrb[0].mxu0 %v1068
          %v1197 = vpop.f32.mrb[0].mxu0
          %v1198 = vadd.f32 %v1005, %v1197
          %v1199 = vpop.f32.mrb[0].mxu0
          %1200 = vmatprep.mubr.f32.mxu0 0.0
          %1201 = vmatmul.mubr.f32.gmra.mrb[0].mxu0 %v1071
          %v1202 = vpop.f32.mrb[0].mxu0
          %v1203 = vadd.f32 %v1010, %v1202
          %v1204 = vpop.f32.mrb[0].mxu0
          %1205 = vmatprep.mubr.f32.mxu0 0.0
          %1206 = vmatmul.mubr.f32.gmra.mrb[0].mxu0 %v1074
          %v1207 = vpop.f32.mrb[0].mxu0
          %v1208 = vadd.f32 %v1015, %v1207
          %v1209 = vpop.f32.mrb[0].mxu0
          %1210 = vmatprep.mubr.f32.mxu0 0.0
          %1211 = vmatmul.mubr.f32.gmra.mrb[0].mxu0 %v1077
          %v1212 = vpop.f32.mrb[0].mxu0
          %v1213 = vadd.f32 %v1020, %v1212
          %v1214 = vpop.f32.mrb[0].mxu0
          %1215 = vmatprep.mubr.f32.mxu0 0.0
          %1216 = vmatmul.mubr.f32.gmra.mrb[0].mxu0 %v1080
          %v1217 = vpop.f32.mrb[0].mxu0
          %v1218 = vadd.f32 %v1025, %v1217
          %v1219 = vpop.f32.mrb[0].mxu0
          %1220 = vmatprep.mubr.f32.mxu0 0.0
          %1221 = vmatmul.mubr.f32.gmra.mrb[0].mxu0 %v1083
          %v1222 = vpop.f32.mrb[0].mxu0
          %v1223 = vadd.f32 %v1030, %v1222
          %v1224 = vpop.f32.mrb[0].mxu0
          %1225 = vmatprep.mubr.f32.mxu0 0.0
          %1226 = vmatmul.mubr.f32.gmra.mrb[0].mxu0 %v1086
          %v1227 = vpop.f32.mrb[0].mxu0
          %v1228 = vadd.f32 %v1035, %v1227
          %v1229 = vpop.f32.mrb[0].mxu0
          %1230 = vmatprep.mubr.f32.mxu0 0.0
          %1231 = vmatmul.mubr.f32.gmra.mrb[0].mxu0 %v1089
          %v1232 = vpop.f32.mrb[0].mxu0
          %v1233 = vadd.f32 %v1040, %v1232
          %v1234 = vpop.f32.mrb[0].mxu0
          %1235 = vdwg.mxu0
          %v1236 = vld [vmem:[%s7] sm:$0x1]
          %v1238 = vlaneseq
          %v1239 = vshrl.u32 %v1238, 7
          %v1240 = vsub.s32 0, %v1239
          %v1241 = vrot.slane %v1236, %v1240
          %v1243 = vadd.f32 %v1158, %v1241
          %v1244 = vadd.f32 %v1163, %v1241
          %v1245 = vadd.f32 %v1168, %v1241
          %v1246 = vadd.f32 %v1173, %v1241
          %v1247 = vadd.f32 %v1178, %v1241
          %v1248 = vadd.f32 %v1183, %v1241
          %v1249 = vadd.f32 %v1188, %v1241
          %v1250 = vadd.f32 %v1193, %v1241
          %v1251 = vadd.f32 %v1198, %v1241
          %v1252 = vadd.f32 %v1203, %v1241
          %v1253 = vadd.f32 %v1208, %v1241
          %v1254 = vadd.f32 %v1213, %v1241
          %v1255 = vadd.f32 %v1218, %v1241
          %v1256 = vadd.f32 %v1223, %v1241
          %v1257 = vadd.f32 %v1228, %v1241
          %v1258 = vadd.f32 %v1233, %v1241
          %vm1259 = vcmp.gt.f32.partialorder %v1243, 0.0
          %vm1260 = vcmp.gt.f32.partialorder %v1244, 0.0
          %vm1261 = vcmp.gt.f32.partialorder %v1245, 0.0
          %vm1262 = vcmp.gt.f32.partialorder %v1246, 0.0
          %vm1263 = vcmp.gt.f32.partialorder %v1247, 0.0
          %vm1264 = vcmp.gt.f32.partialorder %v1248, 0.0
          %vm1265 = vcmp.gt.f32.partialorder %v1249, 0.0
          %vm1266 = vcmp.gt.f32.partialorder %v1250, 0.0
          %vm1267 = vcmp.gt.f32.partialorder %v1251, 0.0
          %vm1268 = vcmp.gt.f32.partialorder %v1252, 0.0
          %vm1269 = vcmp.gt.f32.partialorder %v1253, 0.0
          %vm1270 = vcmp.gt.f32.partialorder %v1254, 0.0
          %vm1271 = vcmp.gt.f32.partialorder %v1255, 0.0
          %vm1272 = vcmp.gt.f32.partialorder %v1256, 0.0
          %vm1273 = vcmp.gt.f32.partialorder %v1257, 0.0
          %vm1274 = vcmp.gt.f32.partialorder %v1258, 0.0
          %v1275 = vmul.f32 %v1243, 0.2
          %v1276 = vmul.f32 %v1244, 0.2
          %v1277 = vmul.f32 %v1245, 0.2
          %v1278 = vmul.f32 %v1246, 0.2
          %v1279 = vmul.f32 %v1247, 0.2
          %v1280 = vmul.f32 %v1248, 0.2
          %v1281 = vmul.f32 %v1249, 0.2
          %v1282 = vmul.f32 %v1250, 0.2
          %v1283 = vmul.f32 %v1251, 0.2
          %v1284 = vmul.f32 %v1252, 0.2
          %v1285 = vmul.f32 %v1253, 0.2
          %v1286 = vmul.f32 %v1254, 0.2
          %v1287 = vmul.f32 %v1255, 0.2
          %v1288 = vmul.f32 %v1256, 0.2
          %v1289 = vmul.f32 %v1257, 0.2
          %v1290 = vmul.f32 %v1258, 0.2
          %v1291 = vsel %vm1259, %v1243, %v1275
          %v1292 = vsel %vm1260, %v1244, %v1276
          %v1293 = vsel %vm1261, %v1245, %v1277
          %v1294 = vsel %vm1262, %v1246, %v1278
          %v1295 = vsel %vm1263, %v1247, %v1279
          %v1296 = vsel %vm1264, %v1248, %v1280
          %v1297 = vsel %vm1265, %v1249, %v1281
          %v1298 = vsel %vm1266, %v1250, %v1282
          %v1299 = vsel %vm1267, %v1251, %v1283
          %v1300 = vsel %vm1268, %v1252, %v1284
          %v1301 = vsel %vm1269, %v1253, %v1285
          %v1302 = vsel %vm1270, %v1254, %v1286
          %v1303 = vsel %vm1271, %v1255, %v1287
          %v1304 = vsel %vm1272, %v1256, %v1288
          %v1305 = vsel %vm1273, %v1257, %v1289
          %v1306 = vsel %vm1274, %v1258, %v1290
          %v1307 = vmul.f32 %v1291, %v1291
          %v1308 = vmul.f32 %v1292, %v1292
          %v1309 = vmul.f32 %v1293, %v1293
          %v1310 = vmul.f32 %v1294, %v1294
          %v1311 = vmul.f32 %v1295, %v1295
          %v1312 = vmul.f32 %v1296, %v1296
          %v1313 = vmul.f32 %v1297, %v1297
          %v1314 = vmul.f32 %v1298, %v1298
          %v1315 = vmul.f32 %v1299, %v1299
          %v1316 = vmul.f32 %v1300, %v1300
          %v1317 = vmul.f32 %v1301, %v1301
          %v1318 = vmul.f32 %v1302, %v1302
          %v1319 = vmul.f32 %v1303, %v1303
          %v1320 = vmul.f32 %v1304, %v1304
          %v1321 = vmul.f32 %v1305, %v1305
          %v1322 = vmul.f32 %v1306, %v1306
          %v1323 = vsel %vm849, %v1307, 0.0
          %1324 = vadd.xlane.f32.xlu0 %v1323
          %v1325 = vpop.xlane.xlu0 %1324
          %v1326 = vsel %vm849, %v1308, 0.0
          %1327 = vadd.xlane.f32.xlu0 %v1326
          %v1328 = vpop.xlane.xlu0 %1327
          %v1329 = vsel %vm849, %v1309, 0.0
          %1330 = vadd.xlane.f32.xlu0 %v1329
          %v1331 = vpop.xlane.xlu0 %1330
          %v1332 = vsel %vm849, %v1310, 0.0
          %1333 = vadd.xlane.f32.xlu0 %v1332
          %v1334 = vpop.xlane.xlu0 %1333
          %v1335 = vsel %vm849, %v1311, 0.0
          %1336 = vadd.xlane.f32.xlu0 %v1335
          %v1337 = vpop.xlane.xlu0 %1336
          %v1338 = vsel %vm849, %v1312, 0.0
          %1339 = vadd.xlane.f32.xlu0 %v1338
          %v1340 = vpop.xlane.xlu0 %1339
          %v1341 = vsel %vm849, %v1313, 0.0
          %1342 = vadd.xlane.f32.xlu0 %v1341
          %v1343 = vpop.xlane.xlu0 %1342
          %v1344 = vsel %vm849, %v1314, 0.0
          %1345 = vadd.xlane.f32.xlu0 %v1344
          %v1346 = vpop.xlane.xlu0 %1345
          %v1347 = vsel %vm849, %v1315, 0.0
          %1348 = vadd.xlane.f32.xlu0 %v1347
          %v1349 = vpop.xlane.xlu0 %1348
          %v1350 = vsel %vm849, %v1316, 0.0
          %1351 = vadd.xlane.f32.xlu0 %v1350
          %v1352 = vpop.xlane.xlu0 %1351
          %v1353 = vsel %vm849, %v1317, 0.0
          %1354 = vadd.xlane.f32.xlu0 %v1353
          %v1355 = vpop.xlane.xlu0 %1354
          %v1356 = vsel %vm849, %v1318, 0.0
          %1357 = vadd.xlane.f32.xlu0 %v1356
          %v1358 = vpop.xlane.xlu0 %1357
          %v1359 = vsel %vm849, %v1319, 0.0
          %1360 = vadd.xlane.f32.xlu0 %v1359
          %v1361 = vpop.xlane.xlu0 %1360
          %v1362 = vsel %vm849, %v1320, 0.0
          %1363 = vadd.xlane.f32.xlu0 %v1362
          %v1364 = vpop.xlane.xlu0 %1363
          %v1365 = vsel %vm849, %v1321, 0.0
          %1366 = vadd.xlane.f32.xlu0 %v1365
          %v1367 = vpop.xlane.xlu0 %1366
          %v1368 = vsel %vm849, %v1322, 0.0
          %1369 = vadd.xlane.f32.xlu0 %v1368
          %v1370 = vpop.xlane.xlu0 %1369
          %v1371 = vmax.f32 %v1325, 1e-24
          %v1372 = vmax.f32 %v1328, 1e-24
          %v1373 = vmax.f32 %v1331, 1e-24
          %v1374 = vmax.f32 %v1334, 1e-24
          %v1375 = vmax.f32 %v1337, 1e-24
          %v1376 = vmax.f32 %v1340, 1e-24
          %v1377 = vmax.f32 %v1343, 1e-24
          %v1378 = vmax.f32 %v1346, 1e-24
          %v1379 = vmax.f32 %v1349, 1e-24
          %v1380 = vmax.f32 %v1352, 1e-24
          %v1381 = vmax.f32 %v1355, 1e-24
          %v1382 = vmax.f32 %v1358, 1e-24
          %v1383 = vmax.f32 %v1361, 1e-24
          %v1384 = vmax.f32 %v1364, 1e-24
          %v1385 = vmax.f32 %v1367, 1e-24
          %v1386 = vmax.f32 %v1370, 1e-24
          %v1387 = vrsqrt.pop %v1371
          %v1388 = vrsqrt.pop %v1372
          %v1389 = vrsqrt.pop %v1373
          %v1390 = vrsqrt.pop %v1374
          %v1391 = vrsqrt.pop %v1375
          %v1392 = vrsqrt.pop %v1376
          %v1393 = vrsqrt.pop %v1377
          %v1394 = vrsqrt.pop %v1378
          %v1395 = vrsqrt.pop %v1379
          %v1396 = vrsqrt.pop %v1380
          %v1397 = vrsqrt.pop %v1381
          %v1398 = vrsqrt.pop %v1382
          %v1399 = vrsqrt.pop %v1383
          %v1400 = vrsqrt.pop %v1384
          %v1401 = vrsqrt.pop %v1385
          %v1402 = vrsqrt.pop %v1386
          %v1403 = vmul.f32 %v1291, %v1387
          %v1404 = vmul.f32 %v1292, %v1388
          %v1405 = vmul.f32 %v1293, %v1389
          %v1406 = vmul.f32 %v1294, %v1390
          %v1407 = vmul.f32 %v1295, %v1391
          %v1408 = vmul.f32 %v1296, %v1392
          %v1409 = vmul.f32 %v1297, %v1393
          %v1410 = vmul.f32 %v1298, %v1394
          %v1411 = vmul.f32 %v1299, %v1395
          %v1412 = vmul.f32 %v1300, %v1396
          %v1413 = vmul.f32 %v1301, %v1397
          %v1414 = vmul.f32 %v1302, %v1398
          %v1415 = vmul.f32 %v1303, %v1399
          %v1416 = vmul.f32 %v1304, %v1400
          %v1417 = vmul.f32 %v1305, %v1401
          %v1418 = vmul.f32 %v1306, %v1402
          %1435 = vrot.lane.b32.xlu0 %v1403, 64
          %v1436 = vpop.permute.xlu0 %1435
          %1437 = vrot.lane.b32.xlu0 %v1404, 64
          %v1438 = vpop.permute.xlu0 %1437
          %1439 = vrot.lane.b32.xlu0 %v1405, 64
          %v1440 = vpop.permute.xlu0 %1439
          %1441 = vrot.lane.b32.xlu0 %v1406, 64
          %v1442 = vpop.permute.xlu0 %1441
          %1443 = vrot.lane.b32.xlu0 %v1407, 64
          %v1444 = vpop.permute.xlu0 %1443
          %1445 = vrot.lane.b32.xlu0 %v1408, 64
          %v1446 = vpop.permute.xlu0 %1445
          %1447 = vrot.lane.b32.xlu0 %v1409, 64
          %v1448 = vpop.permute.xlu0 %1447
          %1449 = vrot.lane.b32.xlu0 %v1410, 64
          %v1450 = vpop.permute.xlu0 %1449
          %1451 = vrot.lane.b32.xlu0 %v1411, 64
          %v1452 = vpop.permute.xlu0 %1451
          %1453 = vrot.lane.b32.xlu0 %v1412, 64
          %v1454 = vpop.permute.xlu0 %1453
          %1455 = vrot.lane.b32.xlu0 %v1413, 64
          %v1456 = vpop.permute.xlu0 %1455
          %1457 = vrot.lane.b32.xlu0 %v1414, 64
          %v1458 = vpop.permute.xlu0 %1457
          %1459 = vrot.lane.b32.xlu0 %v1415, 64
          %v1460 = vpop.permute.xlu0 %1459
          %1461 = vrot.lane.b32.xlu0 %v1416, 64
          %v1462 = vpop.permute.xlu0 %1461
          %1463 = vrot.lane.b32.xlu0 %v1417, 64
          %v1464 = vpop.permute.xlu0 %1463
          %1465 = vrot.lane.b32.xlu0 %v1418, 64
          %v1466 = vpop.permute.xlu0 %1465
          %v1483 = vsel %vm849, %v1291, %v1436
          %v1484 = vsel %vm849, %v1292, %v1438
          %v1485 = vsel %vm849, %v1293, %v1440
          %v1486 = vsel %vm849, %v1294, %v1442
          %v1487 = vsel %vm849, %v1295, %v1444
          %v1488 = vsel %vm849, %v1296, %v1446
          %v1489 = vsel %vm849, %v1297, %v1448
          %v1490 = vsel %vm849, %v1298, %v1450
          %v1491 = vsel %vm849, %v1299, %v1452
          %v1492 = vsel %vm849, %v1300, %v1454
          %v1493 = vsel %vm849, %v1301, %v1456
          %v1494 = vsel %vm849, %v1302, %v1458
          %v1495 = vsel %vm849, %v1303, %v1460
          %v1496 = vsel %vm849, %v1304, %v1462
          %v1497 = vsel %vm849, %v1305, %v1464
          %v1498 = vsel %vm849, %v1306, %v1466
          %1499 = vst [vmem:[%s334] sm:$0xff] %v1483
          %1500 = vst [vmem:[%s334 + $0x8] sm:$0xff] %v1484
          %1501 = vst [vmem:[%s334 + $0x10] sm:$0xff] %v1485
          %1502 = vst [vmem:[%s334 + $0x18] sm:$0xff] %v1486
          %1503 = vst [vmem:[%s334 + $0x20] sm:$0xff] %v1487
          %1504 = vst [vmem:[%s334 + $0x28] sm:$0xff] %v1488
          %1505 = vst [vmem:[%s334 + $0x30] sm:$0xff] %v1489
          %1506 = vst [vmem:[%s334 + $0x38] sm:$0xff] %v1490
          %1507 = vst [vmem:[%s334 + $0x40] sm:$0xff] %v1491
          %1508 = vst [vmem:[%s334 + $0x48] sm:$0xff] %v1492
          %1509 = vst [vmem:[%s334 + $0x50] sm:$0xff] %v1493
          %1510 = vst [vmem:[%s334 + $0x58] sm:$0xff] %v1494
          %1511 = vst [vmem:[%s334 + $0x60] sm:$0xff] %v1495
          %1512 = vst [vmem:[%s334 + $0x68] sm:$0xff] %v1496
          %1513 = vst [vmem:[%s334 + $0x70] sm:$0xff] %v1497
          %1514 = vst [vmem:[%s334 + $0x78] sm:$0xff] %v1498
        $region56: #{tpu_custom_call.1} parent=43 // pred_fallthru
          _
        %s1515 = sand.u32 %s203, 1
        %s1516 = scalar_lea.sflag [#allocation7], %s1515
        %s1517 = sand.u32 %s203, 1
        %s1518 = smul.addr %s1517, 128
        %s1519 = scalar_lea.vmem [#allocation6], %s1518
        // Predicated region
        $region57: #{tpu_custom_call.1} parent=43 // pred_check
          %p1520 = pneg %p213
        $region58: #{tpu_custom_call.1} parent=43 // pred_check_branch
          %1522 = sbr.rel (%p1520) target = $region60
        $region59: #{tpu_custom_call.1} parent=43 // pred_region
          %s1523 = smul.u32 16, %s36
          %s1525 = ssub.s32 2048, 2048
          %1526 = vsyncadd %s1516, %s1525
          %s1527 = smul.addr %s1523, 128
          %s1528 = scalar_lea.hbm %s8, %s1527
          %s1529 = sshll.u32 %s1519, 4
          %s1530 = int_to_ptr.vmem [resolvable:$true] %s1529
          %1535 = dma.vmem_to_hbm [thread:$0]  %s1530, 2048, %s1528, %s1516, 128, 128, 8
        $region60: #{tpu_custom_call.1} parent=43 // pred_fallthru
          _
      $region44: #{tpu_custom_call.1} parent=5 // pred_fallthru
        _
      %p1536 = scmp.le.s32.totalorder 2, %s27
      // Predicated region
      $region61: #{tpu_custom_call.1} parent=5 // pred_check
        %p1537 = pneg %p1536
      $region62: #{tpu_custom_call.1} parent=5 // pred_check_branch
        %1539 = sbr.rel (%p1537) target = $region64
      $region63: #{tpu_custom_call.1} parent=5 // pred_region
        %s1540 = ssub.s32 %s27, 2
        // Predicated region
        $region65: #{tpu_custom_call.1} parent=63 // pred_check
          %p1541 = pneg %p219
        $region66: #{tpu_custom_call.1} parent=63 // pred_check_branch
          %1543 = sbr.rel (%p1541) target = $region68
        $region67: #{tpu_custom_call.1} parent=63 // pred_region
          %s1544 = sand.u32 %s204, 1
          %s1545 = scalar_lea.sflag [#allocation7], %s1544
          %s1546 = sand.u32 %s204, 1
          %s1547 = smul.addr %s1546, 128
          %s1548 = scalar_lea.vmem [#allocation6], %s1547
          %1549 = dma.done %s1545, 2048
        $region68: #{tpu_custom_call.1} parent=63 // pred_fallthru
          _
      $region64: #{tpu_custom_call.1} parent=5 // pred_fallthru
        _
    $region6: #{tpu_custom_call.1} parent=1 // loop_footer
      %s31 = sadd.s32 1, %s27
    $region7: #{tpu_custom_call.1} parent=1 // loop_footer_branch
      %26 = sbr.rel target = $region3
    $region8: #{tpu_custom_call.1} parent=1 // loop_exit
      _
    %1550 = vsyncpa [#allocation7], 1
    %s1551 = scalar_lea.sflag [#allocation7], 1
    %1552 = vsyncpa %s1551, 1

</llo_original>
